<compile_context>
chip_gen: v7x
topology: tpu7x:2x2x1
jax: 0.10.0
libtpu: 0.0.40
codegen_flags: <defaults>
</compile_context>

<pallas_src>
import functools

import jax
import jax.numpy as jnp
from jax.experimental import pallas as pl
from jax.experimental.pallas import tpu as pltpu


def _round_up(n, m):
    return ((n + m - 1) // m) * m


def _cdiv(a, b):
    return -(-a // b)


def _tpu_arch():
    """Returns (tensorcores_per_chip, per_step_row_budget).

    v7x: 2 TensorCores, 64 MiB VMEM per core -> split the grid, smaller tiles.
    v5e/v6e: 1 TensorCore, 128 MiB VMEM -> fewer, bigger grid steps.
    Conservative fallback if the device kind cannot be queried.
    """
    try:
        kind = jax.devices()[0].device_kind.lower()
    except Exception:
        kind = ""
    if "v5" in kind or "v6" in kind:
        return 1, 4096
    if "7" in kind:
        return 2, 2048
    return 1, 2048


def _choose_batch_tile(B, L, num_tc, target_rows):
    """Batch elements per grid step.  Single-TC chips: as few steps as the row
    budget allows.  Multi-TC (v7x): at least num_tc steps and an even number of
    steps so the 'parallel' grid axis splits evenly across the cores."""
    bt_max = max(1, min(B, max(1, target_rows // L)))
    nbt = _cdiv(B, bt_max)
    if num_tc > 1 and B > 1:
        nbt = max(nbt, num_tc)
        nbt = min(_round_up(nbt, num_tc), B)
    return _cdiv(B, nbt)


def _vmem_limit_bytes(Bt, S, L, C_in, inner, K, S2, num_tc):
    """Only raise the scoped-VMEM limit when the estimate exceeds the default."""
    M = Bt * L
    est = (2 * Bt * S * C_in * 4            # x block, double-buffered
           + Bt * L * C_in * 4              # staging scratch
           + 2 * M * 128 * 4                # (M,1) mask (lane padded)
           + 2 * K * (C_in + inner) * inner * 2   # bf16 conv weights
           + 2 * 8 * inner * 4              # packed parameter tile
           + 2 * Bt * max(S2, 128) * 4      # output block
           + 8 * M * inner * 4)             # live (M, inner) intermediates
    if est <= (32 << 20):
        return None
    cap = (48 << 20) if num_tc > 1 else (100 << 20)
    return int(min(cap, _round_up(est, 1 << 20)))


def _shift_rows(x, shift):
    """y[i] = x[(i + shift) mod M] along axis 0 via an XLU roll (no relayout)."""
    m = x.shape[0]
    if shift % m == 0:
        return x
    return pltpu.roll(x, shift=(-shift) % m, axis=0)


def _layer_norm_relu(x, gamma, beta, eps=1e-5):
    """Single-pass LayerNorm (E[x^2]-mu^2, gamma folded into the rsqrt scale)
    followed by ReLU.  Matches torch.nn.LayerNorm (biased variance)."""
    inv_n = 1.0 / x.shape[-1]
    mu = jnp.sum(x, axis=-1, keepdims=True) * inv_n
    ex2 = jnp.sum(x * x, axis=-1, keepdims=True) * inv_n
    scale = gamma * jax.lax.rsqrt(ex2 - mu * mu + eps)
    return jnp.maximum((x - mu) * scale + beta, 0.0)


def _dp_kernel(pad, x_ref, w1_ref, w2_ref, vec_ref, mask_ref, bl_ref,
               out_ref, xbuf_ref):
    # x_ref:    (Bt, S, C_in) raw encoder rows for this batch tile (no host pad)
    # w1_ref:   (K, C_in, inner) bf16,  w2_ref: (K, inner, inner) bf16
    # vec_ref:  (8, inner) f32 rows = [b1, g1, beta1, b2, g2, beta2, w_lin, 0]
    # mask_ref: (Bt*L, 1) f32, 1.0 on valid conv1 output rows, 0.0 elsewhere
    # bl_ref:   (1, 1) f32 scalar linear bias (SMEM)
    # out_ref:  (1, Bt, S2) lane-dense output block
    # xbuf_ref: (Bt, L, C_in) f32 staging scratch (data rows + zero tail)
    Bt, L, C_in = xbuf_ref.shape
    S = x_ref.shape[1]
    K = w1_ref.shape[0]
    inner = w1_ref.shape[2]
    S2 = out_ref.shape[2]
    M = Bt * L
    bf16 = jnp.bfloat16

    # Stage raw rows into the zero-tailed per-element layout.  Tail rows are
    # re-zeroed every step (cheap) so correctness holds under megacore grid
    # splitting and ragged last batch tiles.
    if L > S:
        xbuf_ref[:, S:, :] = jnp.zeros((Bt, L - S, C_in), jnp.float32)
    xbuf_ref[:, :S, :] = x_ref[...]
    # L % 8 == 0, so merging (Bt, L) into Bt*L sublane rows is layout free.
    x = xbuf_ref[...].reshape(M, C_in)

    # ---- conv1d_1: out[r] = sum_t x[r + t - pad] @ w1[t] ----
    # First tap initializes the accumulator (no zeros+add pass); the dot chain
    # stays contiguous so v7x can keep the K-tap sum in the MXU result buffer.
    acc = jnp.dot(_shift_rows(x, -pad).astype(bf16), w1_ref[0],
                  preferred_element_type=jnp.float32)
    for t in range(1, K):
        acc = acc + jnp.dot(_shift_rows(x, t - pad).astype(bf16), w1_ref[t],
                            preferred_element_type=jnp.float32)
    h = acc + vec_ref[0:1, :]
    # ---- layer_norm_1 + relu (dropout = identity) ----
    h = _layer_norm_relu(h, vec_ref[1:2, :], vec_ref[2:3, :])
    # Zero rows outside each element's valid conv1 output: these zeros ARE
    # conv2's zero padding and stop cross-element leakage through the rolls.
    # jnp.where (not multiply) so NaN garbage from out-of-batch slots of a
    # ragged last tile can never propagate into valid elements.
    h = jnp.where(mask_ref[...] > 0.5, h, 0.0)

    # ---- conv1d_2: out[r] = sum_t h[r + t - pad] @ w2[t] ----
    acc2 = jnp.dot(_shift_rows(h, -pad).astype(bf16), w2_ref[0],
                   preferred_element_type=jnp.float32)
    for t in range(1, K):
        acc2 = acc2 + jnp.dot(_shift_rows(h, t - pad).astype(bf16), w2_ref[t],
                              preferred_element_type=jnp.float32)
    h2 = acc2 + vec_ref[3:4, :]
    # ---- layer_norm_2 + relu (dropout = identity) ----
    h2 = _layer_norm_relu(h2, vec_ref[4:5, :], vec_ref[5:6, :])

    # ---- linear_layer (inner -> 1) + relu, lane-dense (Bt, S2) output ----
    lin = jnp.sum(h2.reshape(Bt, L, inner) * vec_ref[6:7, :], axis=-1)  # (Bt, L)
    out_ref[0] = jnp.maximum(lin[:, :S2] + bl_ref[0, 0], 0.0)


def duration_predictor(encoder_output, params, kernel_size, padding_size):
    """encoder_output: [B, S, inp_dim] -> torch forward() output, i.e.
    out.squeeze().unsqueeze(0): (1, B, S_out) for B > 1, (1, S_out) for B == 1."""
    B, S, C_in = encoder_output.shape
    w1, b1, g1, be1, w2, b2, g2, be2, wl, bl = params
    K, pad = kernel_size, padding_size
    inner = w1.shape[2]

    S1 = S + 2 * pad - K + 1            # conv1 output length
    S2 = S1 + 2 * pad - K + 1           # conv2 output length
    assert S1 >= 1 and S2 >= 1, "sequence too short for this kernel/padding"

    # Per-element row budget (sublane multiple).  Invariants required by the
    # roll wrap-around across element boundaries (see kernel comments):
    L = _round_up(max(S + pad, S1 + pad, S2), 8)
    assert L % 8 == 0
    assert L >= S + pad and L >= S1 + pad and L >= S2

    num_tc, target_rows = _tpu_arch()
    Bt = _choose_batch_tile(B, L, num_tc, target_rows)
    nbt = _cdiv(B, Bt)
    M = Bt * L

    x = encoder_output.astype(jnp.float32)
    w1b = jnp.asarray(w1, jnp.bfloat16)
    w2b = jnp.asarray(w2, jnp.bfloat16)
    # Pack the 7 per-channel parameter vectors into a single (8, inner) tile.
    vec = jnp.concatenate(
        [b1, g1, be1, b2, g2, be2, wl, jnp.zeros((1, inner), jnp.float32)],
        axis=0).astype(jnp.float32)
    bl_smem = jnp.asarray(bl, jnp.float32).reshape(1, 1)
    # Host-precomputed validity mask over local rows (tiny, constant per config).
    mask = jnp.tile((jnp.arange(L) < S1).astype(jnp.float32), Bt).reshape(M, 1)

    kernel = functools.partial(_dp_kernel, pad)

    cp_kwargs = dict(dimension_semantics=("parallel",))
    vmem_limit = _vmem_limit_bytes(Bt, S, L, C_in, inner, K, S2, num_tc)
    if vmem_limit is not None:
        cp_kwargs["vmem_limit_bytes"] = vmem_limit

    out = pl.pallas_call(
        kernel,
        out_shape=jax.ShapeDtypeStruct((nbt, Bt, S2), jnp.float32),
        grid_spec=pltpu.PrefetchScalarGridSpec(
            num_scalar_prefetch=0,
            grid=(nbt,),
            in_specs=[
                pl.BlockSpec((Bt, S, C_in), lambda i: (i, 0, 0)),        # x (raw)
                pl.BlockSpec((K, C_in, inner), lambda i: (0, 0, 0)),     # w1 (const)
                pl.BlockSpec((K, inner, inner), lambda i: (0, 0, 0)),    # w2 (const)
                pl.BlockSpec((8, inner), lambda i: (0, 0)),              # packed vecs
                pl.BlockSpec((M, 1), lambda i: (0, 0)),                  # row mask
                pl.BlockSpec(memory_space=pltpu.MemorySpace.SMEM),       # linear bias
            ],
            out_specs=pl.BlockSpec((1, Bt, S2), lambda i: (i, 0, 0)),
            scratch_shapes=[pltpu.VMEM((Bt, L, C_in), jnp.float32)],
        ),
        compiler_params=pltpu.CompilerParams(**cp_kwargs),
    )(x, w1b, w2b, vec, mask, bl_smem)

    out = out.reshape(nbt * Bt, S2)[:B]
    # torch: out.squeeze().unsqueeze(0)
    return jnp.squeeze(out)[None]


def _reference_forward(x, params, K, pad):
    """Pure-JAX f32 reference (different code path) mirroring the torch module."""
    w1, b1, g1, be1, w2, b2, g2, be2, wl, bl = params

    def conv(h, w, b):
        hp = jnp.pad(h, ((0, 0), (pad, pad), (0, 0)))
        s_out = h.shape[1] + 2 * pad - K + 1
        acc = sum(jnp.einsum('bsc,cd->bsd', hp[:, t:t + s_out, :], w[t])
                  for t in range(K))
        return acc + b

    def ln(h, g, bb):
        mu = h.mean(-1, keepdims=True)
        var = ((h - mu) ** 2).mean(-1, keepdims=True)
        return (h - mu) / jnp.sqrt(var + 1e-5) * g + bb

    h = jnp.maximum(ln(conv(x, w1, b1), g1, be1), 0.0)
    h = jnp.maximum(ln(conv(h, w2, b2), g2, be2), 0.0)
    lin = jnp.maximum(jnp.einsum('bsc,c->bs', h, wl[0]) + bl[0, 0], 0.0)
    return jnp.squeeze(lin)[None]


def _make_params(key, C_in, inner, K):
    ks = jax.random.split(key, 10)
    w1 = 0.1 * jax.random.normal(ks[0], (K, C_in, inner), jnp.float32)
    b1 = 0.1 * jax.random.normal(ks[1], (1, inner), jnp.float32)
    g1 = 1.0 + 0.1 * jax.random.normal(ks[2], (1, inner), jnp.float32)
    be1 = 0.1 * jax.random.normal(ks[3], (1, inner), jnp.float32)
    w2 = 0.1 * jax.random.normal(ks[4], (K, inner, inner), jnp.float32)
    b2 = 0.1 * jax.random.normal(ks[5], (1, inner), jnp.float32)
    g2 = 1.0 + 0.1 * jax.random.normal(ks[6], (1, inner), jnp.float32)
    be2 = 0.1 * jax.random.normal(ks[7], (1, inner), jnp.float32)
    wl = 0.1 * jax.random.normal(ks[8], (1, inner), jnp.float32)   # torch Linear [1, inner]
    bl = 0.1 * jax.random.normal(ks[9], (1, 1), jnp.float32)
    return (w1, b1, g1, be1, w2, b2, g2, be2, wl, bl)


if __name__ == "__main__":
    key = jax.random.PRNGKey(0)

    configs = [
        # (B, S, inp_dim, inner_dim, kernel_size, padding_size)
        (3, 12, 128, 128, 3, 1),   # multi-batch, lane-aligned channels
        (1, 8, 32, 32, 3, 1),      # B == 1 (torch .squeeze() quirk), small channels
    ]
    for i, (B, S, C_in, inner, K, pad) in enumerate(configs):
        kp, kx, key = jax.random.split(key, 3)
        params = _make_params(kp, C_in, inner, K)
        encoder_output = jax.random.normal(kx, (B, S, C_in), jnp.float32)

        out = duration_predictor(encoder_output, params, K, pad)
        out = jax.block_until_ready(out)
        ref = _reference_forward(encoder_output, params, K, pad)

        S2 = (S + 2 * pad - K + 1) + 2 * pad - K + 1
        expect_shape = (1, S2) if B == 1 else (1, B, S2)
        assert out.shape == expect_shape, (out.shape, expect_shape)
        # bf16 MXU operands -> looser tolerance than the f32 reference.
        err = jnp.max(jnp.abs(out - ref))
        assert jnp.allclose(out, ref, atol=1e-1, rtol=1e-1), (
            f"config {i}: mismatch vs reference, max abs err {err}")

    print("KERNEL_OK")
</pallas_src>

<mosaic_0001>
module attributes {stable_mosaic.version = 11 : i64} {
  func.func @_dp_kernel(%arg0: i32, %arg1: memref<3x12x128xf32, #tpu.memory_space<vmem>>, %arg2: memref<3x128x128xbf16, #tpu.memory_space<vmem>>, %arg3: memref<3x128x128xbf16, #tpu.memory_space<vmem>>, %arg4: memref<8x128xf32, #tpu.memory_space<vmem>>, %arg5: memref<48x1xf32, #tpu.memory_space<vmem>>, %arg6: memref<1x1xf32, #tpu.memory_space<smem>>, %arg7: memref<1x3x12xf32, #tpu.memory_space<vmem>>, %arg8: memref<3x16x128xf32, #tpu.memory_space<vmem>>) attributes {dimension_semantics = [#tpu.dimension_semantics<parallel>], iteration_bounds = array<i64: 1>, scalar_prefetch = 0 : i64, scratch_operands = 1 : i64, tpu.core_type = #tpu.core_type<tc>, window_params = [{transform_indices = @transform_0, window_bounds = array<i64: 3, 12, 128>}, {pipeline_mode = #tpu.pipeline_mode<synchronous>, transform_indices = @transform_1, window_bounds = array<i64: 3, 128, 128>}, {pipeline_mode = #tpu.pipeline_mode<synchronous>, transform_indices = @transform_2, window_bounds = array<i64: 3, 128, 128>}, {pipeline_mode = #tpu.pipeline_mode<synchronous>, transform_indices = @transform_3, window_bounds = array<i64: 8, 128>}, {pipeline_mode = #tpu.pipeline_mode<synchronous>, transform_indices = @transform_4, window_bounds = array<i64: 48, 1>}, {transform_indices = @transform_5, window_bounds = array<i64: 1, 1>}, {transform_indices = @transform_6, window_bounds = array<i64: 1, 3, 12>}]} {
    %cst = arith.constant 0.000000e+00 : f32
    %0 = vector.broadcast %cst : f32 to vector<3x4x128xf32>
    %c0 = arith.constant 0 : index
    %c12 = arith.constant 12 : index
    %c0_0 = arith.constant 0 : index
    %1 = vector.load %arg8[%c0, %c12, %c0_0] : memref<3x16x128xf32, #tpu.memory_space<vmem>>, vector<3x4x128xf32>
    tpu.vector_store %arg8[%c0, %c12, %c0_0], %0 {strides = array<i32>} : memref<3x16x128xf32, #tpu.memory_space<vmem>>, vector<3x4x128xf32>,
    %c0_1 = arith.constant 0 : index
    %c0_2 = arith.constant 0 : index
    %c0_3 = arith.constant 0 : index
    %2 = vector.load %arg1[%c0_1, %c0_2, %c0_3] : memref<3x12x128xf32, #tpu.memory_space<vmem>>, vector<3x12x128xf32>
    %c0_4 = arith.constant 0 : index
    %c0_5 = arith.constant 0 : index
    %c0_6 = arith.constant 0 : index
    %3 = vector.load %arg8[%c0_4, %c0_5, %c0_6] : memref<3x16x128xf32, #tpu.memory_space<vmem>>, vector<3x12x128xf32>
    tpu.vector_store %arg8[%c0_4, %c0_5, %c0_6], %2 {strides = array<i32>} : memref<3x16x128xf32, #tpu.memory_space<vmem>>, vector<3x12x128xf32>,
    %c0_7 = arith.constant 0 : index
    %c0_8 = arith.constant 0 : index
    %c0_9 = arith.constant 0 : index
    %4 = vector.load %arg8[%c0_7, %c0_8, %c0_9] : memref<3x16x128xf32, #tpu.memory_space<vmem>>, vector<3x16x128xf32>
    %5 = vector.shape_cast %4 : vector<3x16x128xf32> to vector<48x128xf32>
    %c1_i32 = arith.constant 1 : i32
    %6 = tpu.dynamic_rotate %5 by %c1_i32 dim 0 : vector<48x128xf32>, i32 -> vector<48x128xf32>
    %7 = arith.truncf %6 : vector<48x128xf32> to vector<48x128xbf16>
    %c0_10 = arith.constant 0 : index
    %c0_11 = arith.constant 0 : index
    %c0_12 = arith.constant 0 : index
    %8 = vector.load %arg2[%c0_10, %c0_11, %c0_12] : memref<3x128x128xbf16, #tpu.memory_space<vmem>>, vector<1x128x128xbf16>
    %9 = vector.shape_cast %8 : vector<1x128x128xbf16> to vector<128x128xbf16>
    %cst_13 = arith.constant dense<0.000000e+00> : vector<48x128xf32>
    %10 = tpu.matmul %7, %9, %cst_13 {dimension_numbers = #tpu.dot_dimension_numbers<[1], [0], [0], [1], [0, 0, 1, 1], [], []>} : vector<48x128xbf16>, vector<128x128xbf16>, vector<48x128xf32> -> vector<48x128xf32>
    %11 = arith.truncf %5 : vector<48x128xf32> to vector<48x128xbf16>
    %c1 = arith.constant 1 : index
    %c0_14 = arith.constant 0 : index
    %c0_15 = arith.constant 0 : index
    %12 = vector.load %arg2[%c1, %c0_14, %c0_15] : memref<3x128x128xbf16, #tpu.memory_space<vmem>>, vector<1x128x128xbf16>
    %13 = vector.shape_cast %12 : vector<1x128x128xbf16> to vector<128x128xbf16>
    %cst_16 = arith.constant dense<0.000000e+00> : vector<48x128xf32>
    %14 = tpu.matmul %11, %13, %cst_16 {dimension_numbers = #tpu.dot_dimension_numbers<[1], [0], [0], [1], [0, 0, 1, 1], [], []>} : vector<48x128xbf16>, vector<128x128xbf16>, vector<48x128xf32> -> vector<48x128xf32>
    %15 = arith.addf %10, %14 : vector<48x128xf32>
    %c47_i32 = arith.constant 47 : i32
    %16 = tpu.dynamic_rotate %5 by %c47_i32 dim 0 : vector<48x128xf32>, i32 -> vector<48x128xf32>
    %17 = arith.truncf %16 : vector<48x128xf32> to vector<48x128xbf16>
    %c2 = arith.constant 2 : index
    %c0_17 = arith.constant 0 : index
    %c0_18 = arith.constant 0 : index
    %18 = vector.load %arg2[%c2, %c0_17, %c0_18] : memref<3x128x128xbf16, #tpu.memory_space<vmem>>, vector<1x128x128xbf16>
    %19 = vector.shape_cast %18 : vector<1x128x128xbf16> to vector<128x128xbf16>
    %cst_19 = arith.constant dense<0.000000e+00> : vector<48x128xf32>
    %20 = tpu.matmul %17, %19, %cst_19 {dimension_numbers = #tpu.dot_dimension_numbers<[1], [0], [0], [1], [0, 0, 1, 1], [], []>} : vector<48x128xbf16>, vector<128x128xbf16>, vector<48x128xf32> -> vector<48x128xf32>
    %21 = arith.addf %15, %20 : vector<48x128xf32>
    %c0_20 = arith.constant 0 : index
    %c0_21 = arith.constant 0 : index
    %22 = vector.load %arg4[%c0_20, %c0_21] : memref<8x128xf32, #tpu.memory_space<vmem>>, vector<1x128xf32>
    %23 = vector.broadcast %22 : vector<1x128xf32> to vector<48x128xf32>
    %24 = arith.addf %21, %23 : vector<48x128xf32>
    %c1_22 = arith.constant 1 : index
    %c0_23 = arith.constant 0 : index
    %25 = vector.load %arg4[%c1_22, %c0_23] : memref<8x128xf32, #tpu.memory_space<vmem>>, vector<1x128xf32>
    %c2_24 = arith.constant 2 : index
    %c0_25 = arith.constant 0 : index
    %26 = vector.load %arg4[%c2_24, %c0_25] : memref<8x128xf32, #tpu.memory_space<vmem>>, vector<1x128xf32>
    %cst_26 = arith.constant dense<0.000000e+00> : vector<48xf32>
    %27 = vector.multi_reduction <add>, %24, %cst_26 [1] : vector<48x128xf32> to vector<48xf32>
    %28 = vector.shape_cast %27 : vector<48xf32> to vector<48x1xf32>
    %cst_27 = arith.constant 7.812500e-03 : f32
    %29 = vector.broadcast %cst_27 : f32 to vector<48x1xf32>
    %30 = arith.mulf %28, %29 : vector<48x1xf32>
    %31 = arith.mulf %24, %24 : vector<48x128xf32>
    %cst_28 = arith.constant dense<0.000000e+00> : vector<48xf32>
    %32 = vector.multi_reduction <add>, %31, %cst_28 [1] : vector<48x128xf32> to vector<48xf32>
    %33 = vector.shape_cast %32 : vector<48xf32> to vector<48x1xf32>
    %cst_29 = arith.constant 7.812500e-03 : f32
    %34 = vector.broadcast %cst_29 : f32 to vector<48x1xf32>
    %35 = arith.mulf %33, %34 : vector<48x1xf32>
    %36 = arith.mulf %30, %30 : vector<48x1xf32>
    %37 = arith.subf %35, %36 : vector<48x1xf32>
    %cst_30 = arith.constant 9.99999974E-6 : f32
    %38 = vector.broadcast %cst_30 : f32 to vector<48x1xf32>
    %39 = arith.addf %37, %38 : vector<48x1xf32>
    %40 = math.rsqrt %39 : vector<48x1xf32>
    %41 = vector.broadcast %25 : vector<1x128xf32> to vector<48x128xf32>
    %42 = vector.broadcast %40 : vector<48x1xf32> to vector<48x128xf32>
    %43 = arith.mulf %41, %42 : vector<48x128xf32>
    %44 = vector.broadcast %30 : vector<48x1xf32> to vector<48x128xf32>
    %45 = arith.subf %24, %44 : vector<48x128xf32>
    %46 = arith.mulf %45, %43 : vector<48x128xf32>
    %47 = vector.broadcast %26 : vector<1x128xf32> to vector<48x128xf32>
    %48 = arith.addf %46, %47 : vector<48x128xf32>
    %cst_31 = arith.constant 0.000000e+00 : f32
    %49 = vector.broadcast %cst_31 : f32 to vector<48x128xf32>
    %50 = arith.maximumf %48, %49 : vector<48x128xf32>
    %c0_32 = arith.constant 0 : index
    %c0_33 = arith.constant 0 : index
    %51 = vector.load %arg5[%c0_32, %c0_33] : memref<48x1xf32, #tpu.memory_space<vmem>>, vector<48x1xf32>
    %cst_34 = arith.constant 5.000000e-01 : f32
    %52 = vector.broadcast %cst_34 : f32 to vector<48x1xf32>
    %53 = arith.cmpf ogt, %51, %52 : vector<48x1xf32>
    %cst_35 = arith.constant 0.000000e+00 : f32
    %54 = vector.shape_cast %53 : vector<48x1xi1> to vector<48x1xi1>
    %55 = vector.broadcast %54 : vector<48x1xi1> to vector<48x128xi1>
    %56 = vector.broadcast %cst_35 : f32 to vector<48x128xf32>
    %57 = arith.select %55, %50, %56 : vector<48x128xi1>, vector<48x128xf32>
    %c1_i32_36 = arith.constant 1 : i32
    %58 = tpu.dynamic_rotate %57 by %c1_i32_36 dim 0 : vector<48x128xf32>, i32 -> vector<48x128xf32>
    %59 = arith.truncf %58 : vector<48x128xf32> to vector<48x128xbf16>
    %c0_37 = arith.constant 0 : index
    %c0_38 = arith.constant 0 : index
    %c0_39 = arith.constant 0 : index
    %60 = vector.load %arg3[%c0_37, %c0_38, %c0_39] : memref<3x128x128xbf16, #tpu.memory_space<vmem>>, vector<1x128x128xbf16>
    %61 = vector.shape_cast %60 : vector<1x128x128xbf16> to vector<128x128xbf16>
    %cst_40 = arith.constant dense<0.000000e+00> : vector<48x128xf32>
    %62 = tpu.matmul %59, %61, %cst_40 {dimension_numbers = #tpu.dot_dimension_numbers<[1], [0], [0], [1], [0, 0, 1, 1], [], []>} : vector<48x128xbf16>, vector<128x128xbf16>, vector<48x128xf32> -> vector<48x128xf32>
    %63 = arith.truncf %57 : vector<48x128xf32> to vector<48x128xbf16>
    %c1_41 = arith.constant 1 : index
    %c0_42 = arith.constant 0 : index
    %c0_43 = arith.constant 0 : index
    %64 = vector.load %arg3[%c1_41, %c0_42, %c0_43] : memref<3x128x128xbf16, #tpu.memory_space<vmem>>, vector<1x128x128xbf16>
    %65 = vector.shape_cast %64 : vector<1x128x128xbf16> to vector<128x128xbf16>
    %cst_44 = arith.constant dense<0.000000e+00> : vector<48x128xf32>
    %66 = tpu.matmul %63, %65, %cst_44 {dimension_numbers = #tpu.dot_dimension_numbers<[1], [0], [0], [1], [0, 0, 1, 1], [], []>} : vector<48x128xbf16>, vector<128x128xbf16>, vector<48x128xf32> -> vector<48x128xf32>
    %67 = arith.addf %62, %66 : vector<48x128xf32>
    %c47_i32_45 = arith.constant 47 : i32
    %68 = tpu.dynamic_rotate %57 by %c47_i32_45 dim 0 : vector<48x128xf32>, i32 -> vector<48x128xf32>
    %69 = arith.truncf %68 : vector<48x128xf32> to vector<48x128xbf16>
    %c2_46 = arith.constant 2 : index
    %c0_47 = arith.constant 0 : index
    %c0_48 = arith.constant 0 : index
    %70 = vector.load %arg3[%c2_46, %c0_47, %c0_48] : memref<3x128x128xbf16, #tpu.memory_space<vmem>>, vector<1x128x128xbf16>
    %71 = vector.shape_cast %70 : vector<1x128x128xbf16> to vector<128x128xbf16>
    %cst_49 = arith.constant dense<0.000000e+00> : vector<48x128xf32>
    %72 = tpu.matmul %69, %71, %cst_49 {dimension_numbers = #tpu.dot_dimension_numbers<[1], [0], [0], [1], [0, 0, 1, 1], [], []>} : vector<48x128xbf16>, vector<128x128xbf16>, vector<48x128xf32> -> vector<48x128xf32>
    %73 = arith.addf %67, %72 : vector<48x128xf32>
    %c3 = arith.constant 3 : index
    %c0_50 = arith.constant 0 : index
    %74 = vector.load %arg4[%c3, %c0_50] : memref<8x128xf32, #tpu.memory_space<vmem>>, vector<1x128xf32>
    %75 = vector.broadcast %74 : vector<1x128xf32> to vector<48x128xf32>
    %76 = arith.addf %73, %75 : vector<48x128xf32>
    %c4 = arith.constant 4 : index
    %c0_51 = arith.constant 0 : index
    %77 = vector.load %arg4[%c4, %c0_51] : memref<8x128xf32, #tpu.memory_space<vmem>>, vector<1x128xf32>
    %c5 = arith.constant 5 : index
    %c0_52 = arith.constant 0 : index
    %78 = vector.load %arg4[%c5, %c0_52] : memref<8x128xf32, #tpu.memory_space<vmem>>, vector<1x128xf32>
    %cst_53 = arith.constant dense<0.000000e+00> : vector<48xf32>
    %79 = vector.multi_reduction <add>, %76, %cst_53 [1] : vector<48x128xf32> to vector<48xf32>
    %80 = vector.shape_cast %79 : vector<48xf32> to vector<48x1xf32>
    %cst_54 = arith.constant 7.812500e-03 : f32
    %81 = vector.broadcast %cst_54 : f32 to vector<48x1xf32>
    %82 = arith.mulf %80, %81 : vector<48x1xf32>
    %83 = arith.mulf %76, %76 : vector<48x128xf32>
    %cst_55 = arith.constant dense<0.000000e+00> : vector<48xf32>
    %84 = vector.multi_reduction <add>, %83, %cst_55 [1] : vector<48x128xf32> to vector<48xf32>
    %85 = vector.shape_cast %84 : vector<48xf32> to vector<48x1xf32>
    %cst_56 = arith.constant 7.812500e-03 : f32
    %86 = vector.broadcast %cst_56 : f32 to vector<48x1xf32>
    %87 = arith.mulf %85, %86 : vector<48x1xf32>
    %88 = arith.mulf %82, %82 : vector<48x1xf32>
    %89 = arith.subf %87, %88 : vector<48x1xf32>
    %cst_57 = arith.constant 9.99999974E-6 : f32
    %90 = vector.broadcast %cst_57 : f32 to vector<48x1xf32>
    %91 = arith.addf %89, %90 : vector<48x1xf32>
    %92 = math.rsqrt %91 : vector<48x1xf32>
    %93 = vector.broadcast %77 : vector<1x128xf32> to vector<48x128xf32>
    %94 = vector.broadcast %92 : vector<48x1xf32> to vector<48x128xf32>
    %95 = arith.mulf %93, %94 : vector<48x128xf32>
    %96 = vector.broadcast %82 : vector<48x1xf32> to vector<48x128xf32>
    %97 = arith.subf %76, %96 : vector<48x128xf32>
    %98 = arith.mulf %97, %95 : vector<48x128xf32>
    %99 = vector.broadcast %78 : vector<1x128xf32> to vector<48x128xf32>
    %100 = arith.addf %98, %99 : vector<48x128xf32>
    %cst_58 = arith.constant 0.000000e+00 : f32
    %101 = vector.broadcast %cst_58 : f32 to vector<48x128xf32>
    %102 = arith.maximumf %100, %101 : vector<48x128xf32>
    %103 = vector.shape_cast %102 : vector<48x128xf32> to vector<3x16x128xf32>
    %c6 = arith.constant 6 : index
    %c0_59 = arith.constant 0 : index
    %104 = vector.load %arg4[%c6, %c0_59] : memref<8x128xf32, #tpu.memory_space<vmem>>, vector<1x128xf32>
    %105 = vector.shape_cast %104 : vector<1x128xf32> to vector<1x1x128xf32>
    %106 = vector.broadcast %105 : vector<1x1x128xf32> to vector<3x16x128xf32>
    %107 = arith.mulf %103, %106 : vector<3x16x128xf32>
    %cst_60 = arith.constant dense<0.000000e+00> : vector<3x16xf32>
    %108 = vector.multi_reduction <add>, %107, %cst_60 [2] : vector<3x16x128xf32> to vector<3x16xf32>
    %109 = vector.extract_strided_slice %108 {offsets = [0, 0], sizes = [3, 12], strides = [1, 1]} : vector<3x16xf32> to vector<3x12xf32>
    %c0_61 = arith.constant 0 : index
    %c0_62 = arith.constant 0 : index
    %110 = memref.load %arg6[%c0_61, %c0_62] : memref<1x1xf32, #tpu.memory_space<smem>>
    %111 = vector.broadcast %110 : f32 to vector<3x12xf32>
    %112 = arith.addf %109, %111 : vector<3x12xf32>
    %cst_63 = arith.constant 0.000000e+00 : f32
    %113 = vector.broadcast %cst_63 : f32 to vector<3x12xf32>
    %114 = arith.maximumf %112, %113 : vector<3x12xf32>
    %c0_64 = arith.constant 0 : index
    %c0_65 = arith.constant 0 : index
    %c0_66 = arith.constant 0 : index
    %115 = vector.load %arg7[%c0_64, %c0_65, %c0_66] : memref<1x3x12xf32, #tpu.memory_space<vmem>>, vector<1x3x12xf32>
    %116 = vector.shape_cast %115 : vector<1x3x12xf32> to vector<3x12xf32>
    %117 = vector.shape_cast %114 : vector<3x12xf32> to vector<1x3x12xf32>
    tpu.vector_store %arg7[%c0_64, %c0_65, %c0_66], %117 {strides = array<i32>} : memref<1x3x12xf32, #tpu.memory_space<vmem>>, vector<1x3x12xf32>,
    return
  }
  func.func @transform_0(%arg0: i32) -> (i32, i32, i32) {
    %c0_i32 = arith.constant 0 : i32
    %c0_i32_0 = arith.constant 0 : i32
    %c0_i32_1 = arith.constant 0 : i32
    return %arg0, %c0_i32, %c0_i32_0 : i32, i32, i32
  }
  func.func @transform_1(%arg0: i32) -> (i32, i32, i32) {
    %c0_i32 = arith.constant 0 : i32
    %c0_i32_0 = arith.constant 0 : i32
    %c0_i32_1 = arith.constant 0 : i32
    %c0_i32_2 = arith.constant 0 : i32
    return %c0_i32, %c0_i32_0, %c0_i32_1 : i32, i32, i32
  }
  func.func @transform_2(%arg0: i32) -> (i32, i32, i32) {
    %c0_i32 = arith.constant 0 : i32
    %c0_i32_0 = arith.constant 0 : i32
    %c0_i32_1 = arith.constant 0 : i32
    %c0_i32_2 = arith.constant 0 : i32
    return %c0_i32, %c0_i32_0, %c0_i32_1 : i32, i32, i32
  }
  func.func @transform_3(%arg0: i32) -> (i32, i32) {
    %c0_i32 = arith.constant 0 : i32
    %c0_i32_0 = arith.constant 0 : i32
    %c0_i32_1 = arith.constant 0 : i32
    return %c0_i32, %c0_i32_0 : i32, i32
  }
  func.func @transform_4(%arg0: i32) -> (i32, i32) {
    %c0_i32 = arith.constant 0 : i32
    %c0_i32_0 = arith.constant 0 : i32
    %c0_i32_1 = arith.constant 0 : i32
    return %c0_i32, %c0_i32_0 : i32, i32
  }
  func.func @transform_5(%arg0: i32) -> (i32, i32) {
    %c0_i32 = arith.constant 0 : i32
    %c0_i32_0 = arith.constant 0 : i32
    %c0_i32_1 = arith.constant 0 : i32
    return %c0_i32, %c0_i32_0 : i32, i32
  }
  func.func @transform_6(%arg0: i32) -> (i32, i32, i32) {
    %c0_i32 = arith.constant 0 : i32
    %c0_i32_0 = arith.constant 0 : i32
    %c0_i32_1 = arith.constant 0 : i32
    return %arg0, %c0_i32, %c0_i32_0 : i32, i32, i32
  }
}

</mosaic_0001>

<llo_original>
// kernel: tpu_custom_call.1
$region0: #{tpu_custom_call.1}
  #allocation0 [shape = 'u32[]', space=smem, size = 0x4, offset = 0x4, fixed_abs, tag = 'smem constant byte address 0x4 - core index']
  #allocation1 [shape = 'u32[144,128]{1,0:T(1,128)}', space=vmem, size = 0x12000, scoped, tag = 'internal scratch']
  #allocation2 [shape = 'f32[3,16,128]{2,1,0:T(8,128)}', space=vmem, size = 0x6000, scoped, tag = 'scratch operand']
  #allocation3 [shape = 'f32[1,1]{1,0:T(1,128)S(6)}', space=smem, size = 0x200, scoped, tag = 'scoped memory for tpu_custom_call.1']
  %s0 = inlined_call_operand.vmem [shape: f32[3,12,128], index: 0, kind: input, shape index: {}]
  %s1 = inlined_call_operand.hbm [shape: bf16[3,128,128], index: 1, kind: input, shape index: {}]
  %s2 = inlined_call_operand.hbm [shape: bf16[3,128,128], index: 2, kind: input, shape index: {}]
  %s3 = inlined_call_operand.vmem [shape: f32[8,128], index: 3, kind: input, shape index: {}]
  %s4 = inlined_call_operand.vmem [shape: f32[48,1], index: 4, kind: input, shape index: {}]
  %s5 = inlined_call_operand.<no memory space> [shape: f32[1,1], index: 5, kind: input, shape index: {}]
  %s6 = inlined_call_operand.vmem [shape: f32[1,3,12], index: 6, kind: output, shape index: {}]
  %s7 = sld [smem:[#allocation0]]
  $region42: #{tpu_custom_call.1} parent=0
    _
  %s9 = ssub.s32 1, %s7
  %s10 = scalar_select 0, %s9, %s7
  %11 = sst [smem:[#allocation3]] %s5
  $region1: #{tpu_custom_call.1} parent=0
    #allocation4 [shape = 'u8[98304]{0}', space=vmem, size = 0x18000, scoped, tag = 'input window, operand 1, single buffered']
    #allocation5 [shape = 's32[1]{0}', space=sflag, size = 0x4, scoped, tag = 'scoped memory for tpu_custom_call.1']
    #allocation6 [shape = 'u8[98304]{0}', space=vmem, size = 0x18000, scoped, tag = 'input window, operand 2, single buffered']
    #allocation7 [shape = 's32[1]{0}', space=sflag, size = 0x4, scoped, tag = 'scoped memory for tpu_custom_call.1']
    %12 = vsyncpa [#allocation5], 0
    %13 = vsyncpa [#allocation7], 0
    // Predicated region
    $region2: #{tpu_custom_call.1} parent=1 // pred_check
      _
    $region3: #{tpu_custom_call.1} parent=1 // pred_check_branch
      %15 = sbr.rel (0) target = $region5
    $region4: #{tpu_custom_call.1} parent=1 // pred_region
      _
    $region5: #{tpu_custom_call.1} parent=1 // pred_fallthru
      _
    // Predicated region
    $region6: #{tpu_custom_call.1} parent=1 // pred_check
      _
    $region7: #{tpu_custom_call.1} parent=1 // pred_check_branch
      %17 = sbr.rel (0) target = $region9
    $region8: #{tpu_custom_call.1} parent=1 // pred_region
      %s19 = ssub.s32 3072, 3072
      %20 = vsyncadd [#allocation5], %s19
      %s21 = sshll.u32 [#allocation4], 4
      %s22 = int_to_ptr.vmem [resolvable:$true] %s21
      %27 = dma.hbm_to_vmem [thread:$0]  %s1, 3072, %s22, [#allocation5], 64, 64, 4
    $region9: #{tpu_custom_call.1} parent=1 // pred_fallthru
      _
    // Predicated region
    $region10: #{tpu_custom_call.1} parent=1 // pred_check
      _
    $region11: #{tpu_custom_call.1} parent=1 // pred_check_branch
      %29 = sbr.rel (0) target = $region13
    $region12: #{tpu_custom_call.1} parent=1 // pred_region
      %s31 = ssub.s32 3072, 3072
      %32 = vsyncadd [#allocation7], %s31
      %s33 = sshll.u32 [#allocation6], 4
      %s34 = int_to_ptr.vmem [resolvable:$true] %s33
      %39 = dma.hbm_to_vmem [thread:$0]  %s2, 3072, %s34, [#allocation7], 64, 64, 4
    $region13: #{tpu_custom_call.1} parent=1 // pred_fallthru
      _
    // Predicated region
    $region14: #{tpu_custom_call.1} parent=1 // pred_check
      _
    $region15: #{tpu_custom_call.1} parent=1 // pred_check_branch
      %41 = sbr.rel (0) target = $region17
    $region16: #{tpu_custom_call.1} parent=1 // pred_region
      _
    $region17: #{tpu_custom_call.1} parent=1 // pred_fallthru
      _
    // Predicated region
    $region18: #{tpu_custom_call.1} parent=1 // pred_check
      _
    $region19: #{tpu_custom_call.1} parent=1 // pred_check_branch
      %43 = sbr.rel (0) target = $region21
    $region20: #{tpu_custom_call.1} parent=1 // pred_region
      _
    $region21: #{tpu_custom_call.1} parent=1 // pred_fallthru
      _
    // Predicated region
    $region22: #{tpu_custom_call.1} parent=1 // pred_check
      _
    $region23: #{tpu_custom_call.1} parent=1 // pred_check_branch
      %45 = sbr.rel (0) target = $region25
    $region24: #{tpu_custom_call.1} parent=1 // pred_region
      _
    $region25: #{tpu_custom_call.1} parent=1 // pred_fallthru
      _
    // Predicated region
    $region26: #{tpu_custom_call.1} parent=1 // pred_check
      _
    $region27: #{tpu_custom_call.1} parent=1 // pred_check_branch
      %47 = sbr.rel (0) target = $region29
    $region28: #{tpu_custom_call.1} parent=1 // pred_region
      %48 = dma.done [#allocation5], 3072
    $region29: #{tpu_custom_call.1} parent=1 // pred_fallthru
      _
    // Predicated region
    $region30: #{tpu_custom_call.1} parent=1 // pred_check
      _
    $region31: #{tpu_custom_call.1} parent=1 // pred_check_branch
      %50 = sbr.rel (0) target = $region33
    $region32: #{tpu_custom_call.1} parent=1 // pred_region
      %51 = dma.done [#allocation7], 3072
    $region33: #{tpu_custom_call.1} parent=1 // pred_fallthru
      _
    %53 = vst [vmem:[#allocation2 + $0xc] sm:$0xf] 0.0
    %54 = vst [vmem:[#allocation2 + $0x1c] sm:$0xf] 0.0
    %55 = vst [vmem:[#allocation2 + $0x2c] sm:$0xf] 0.0
    %v56 = vld [vmem:[%s0] sm:$0xff]
    %v57 = vld [vmem:[%s0 + $0x8] sm:$0xf]
    %v58 = vld [vmem:[%s0 + $0x10] sm:$0xff]
    %v59 = vld [vmem:[%s0 + $0x18] sm:$0xf]
    %v60 = vld [vmem:[%s0 + $0x20] sm:$0xff]
    %v61 = vld [vmem:[%s0 + $0x28] sm:$0xf]
    %62 = vst [vmem:[#allocation2] sm:$0xff] %v56
    %63 = vst [vmem:[#allocation2 + $0x8] sm:$0xf] %v57
    %64 = vst [vmem:[#allocation2 + $0x10] sm:$0xff] %v58
    %65 = vst [vmem:[#allocation2 + $0x18] sm:$0xf] %v59
    %66 = vst [vmem:[#allocation2 + $0x20] sm:$0xff] %v60
    %67 = vst [vmem:[#allocation2 + $0x28] sm:$0xf] %v61
    %v68 = vld [vmem:[#allocation2] sm:$0xff]
    %v69 = vld [vmem:[#allocation2 + $0x8] sm:$0xff]
    %v70 = vld [vmem:[#allocation2 + $0x10] sm:$0xff]
    %v71 = vld [vmem:[#allocation2 + $0x18] sm:$0xff]
    %v72 = vld [vmem:[#allocation2 + $0x20] sm:$0xff]
    %v73 = vld [vmem:[#allocation2 + $0x28] sm:$0xff]
    %v74 = vrot.slane %v68, 7
    %v75 = vrot.slane %v69, 7
    %v76 = vrot.slane %v70, 7
    %v77 = vrot.slane %v71, 7
    %v78 = vrot.slane %v72, 7
    %v79 = vrot.slane %v73, 7
    %v80 = vlaneseq
    %v81 = vshrl.u32 %v80, 7
    %vm82 = vcmp.lt.s32.totalorder %v81, 1
    %v83 = vsel %vm82, %v78, %v79
    %v84 = vsel %vm82, %v77, %v78
    %v85 = vsel %vm82, %v76, %v77
    %v86 = vsel %vm82, %v75, %v76
    %v87 = vsel %vm82, %v74, %v75
    %v88 = vsel %vm82, %v79, %v74
    %v89 = vpack.c.bf16 %v87, %v88
    %v90 = vpack.c.bf16 %v85, %v86
    %v91 = vpack.c.bf16 %v83, %v84
    %v92 = vld [vmem:[#allocation4] sm:$0xf]
    %v93 = vld [vmem:[#allocation4 + $0x4] sm:$0xf]
    %v94 = vld [vmem:[#allocation4 + $0x8] sm:$0xf]
    %v95 = vld [vmem:[#allocation4 + $0xc] sm:$0xf]
    %v96 = vld [vmem:[#allocation4 + $0x10] sm:$0xf]
    %v97 = vld [vmem:[#allocation4 + $0x14] sm:$0xf]
    %v98 = vld [vmem:[#allocation4 + $0x18] sm:$0xf]
    %v99 = vld [vmem:[#allocation4 + $0x1c] sm:$0xf]
    %v100 = vld [vmem:[#allocation4 + $0x20] sm:$0xf]
    %v101 = vld [vmem:[#allocation4 + $0x24] sm:$0xf]
    %v102 = vld [vmem:[#allocation4 + $0x28] sm:$0xf]
    %v103 = vld [vmem:[#allocation4 + $0x2c] sm:$0xf]
    %v104 = vld [vmem:[#allocation4 + $0x30] sm:$0xf]
    %v105 = vld [vmem:[#allocation4 + $0x34] sm:$0xf]
    %v106 = vld [vmem:[#allocation4 + $0x38] sm:$0xf]
    %v107 = vld [vmem:[#allocation4 + $0x3c] sm:$0xf]
    %v108 = vpack.c.bf16 %v69, %v68
    %v109 = vpack.c.bf16 %v71, %v70
    %v110 = vpack.c.bf16 %v73, %v72
    %s111 = scalar_lea.vmem [#allocation4], 64
    %v112 = vld [vmem:[%s111] sm:$0xf]
    %v113 = vld [vmem:[%s111 + $0x4] sm:$0xf]
    %v114 = vld [vmem:[%s111 + $0x8] sm:$0xf]
    %v115 = vld [vmem:[%s111 + $0xc] sm:$0xf]
    %v116 = vld [vmem:[%s111 + $0x10] sm:$0xf]
    %v117 = vld [vmem:[%s111 + $0x14] sm:$0xf]
    %v118 = vld [vmem:[%s111 + $0x18] sm:$0xf]
    %v119 = vld [vmem:[%s111 + $0x1c] sm:$0xf]
    %v120 = vld [vmem:[%s111 + $0x20] sm:$0xf]
    %v121 = vld [vmem:[%s111 + $0x24] sm:$0xf]
    %v122 = vld [vmem:[%s111 + $0x28] sm:$0xf]
    %v123 = vld [vmem:[%s111 + $0x2c] sm:$0xf]
    %v124 = vld [vmem:[%s111 + $0x30] sm:$0xf]
    %v125 = vld [vmem:[%s111 + $0x34] sm:$0xf]
    %v126 = vld [vmem:[%s111 + $0x38] sm:$0xf]
    %v127 = vld [vmem:[%s111 + $0x3c] sm:$0xf]
    %v144 = vunpack.c.l.b16 %v112
    %v145 = vunpack.c.l.b16 %v113
    %v146 = vunpack.c.l.b16 %v114
    %v147 = vunpack.c.l.b16 %v115
    %v148 = vunpack.c.l.b16 %v116
    %v149 = vunpack.c.l.b16 %v117
    %v150 = vunpack.c.l.b16 %v118
    %v151 = vunpack.c.l.b16 %v119
    %v152 = vunpack.c.l.b16 %v120
    %v153 = vunpack.c.l.b16 %v121
    %v154 = vunpack.c.l.b16 %v122
    %v155 = vunpack.c.l.b16 %v123
    %v156 = vunpack.c.l.b16 %v124
    %v157 = vunpack.c.l.b16 %v125
    %v158 = vunpack.c.l.b16 %v126
    %v159 = vunpack.c.l.b16 %v127
    %v160 = vpack.c.b16 %v145, %v144
    %v161 = vpack.c.b16 %v147, %v146
    %v162 = vpack.c.b16 %v149, %v148
    %v163 = vpack.c.b16 %v151, %v150
    %v164 = vpack.c.b16 %v153, %v152
    %v165 = vpack.c.b16 %v155, %v154
    %v166 = vpack.c.b16 %v157, %v156
    %v167 = vpack.c.b16 %v159, %v158
    %176 = vmatprep.subr.bf16.mxu0 0
    %177 = vmatpush1.bf16.msra.mxu0 %v160
    %178 = vmatprep.subr.bf16.mxu0 0
    %179 = vmatpush1.bf16.msra.mxu0 %v161
    %180 = vmatprep.subr.bf16.mxu0 0
    %181 = vmatpush1.bf16.msra.mxu0 %v162
    %182 = vmatprep.subr.bf16.mxu0 0
    %183 = vmatpush1.bf16.msra.mxu0 %v163
    %184 = vmatprep.subr.bf16.mxu0 0
    %185 = vmatpush1.bf16.msra.mxu0 %v164
    %186 = vmatprep.subr.bf16.mxu0 0
    %187 = vmatpush1.bf16.msra.mxu0 %v165
    %188 = vmatprep.subr.bf16.mxu0 0
    %189 = vmatpush1.bf16.msra.mxu0 %v166
    %190 = vmatprep.subr.bf16.mxu0 0
    %191 = vmatpush1.bf16.msra.mxu0 %v167
    %192 = vmatprep.subr.bf16.mxu0 0
    %193 = vmatpush1.bf16.msra.mxu0 0
    %194 = vmatprep.subr.bf16.mxu0 0
    %195 = vmatpush1.bf16.msra.mxu0 0
    %196 = vmatprep.subr.bf16.mxu0 0
    %197 = vmatpush1.bf16.msra.mxu0 0
    %198 = vmatprep.subr.bf16.mxu0 0
    %199 = vmatpush1.bf16.msra.mxu0 0
    %200 = vmatprep.subr.bf16.mxu0 0
    %201 = vmatpush1.bf16.msra.mxu0 0
    %202 = vmatprep.subr.bf16.mxu0 0
    %203 = vmatpush1.bf16.msra.mxu0 0
    %204 = vmatprep.subr.bf16.mxu0 0
    %205 = vmatpush1.bf16.msra.mxu0 0
    %206 = vmatprep.subr.bf16.mxu0 0
    %207 = vmatpush1.bf16.msra.mxu0 0
    %208 = vmatprep.mubr.bf16.mxu0 0
    %209 = vmatmul.mubr.bf16.gmra.mrb[0].mxu0 %v108
    %v210 = vpop.f32.mrb[0].mxu0
    %v211 = vadd.f32 0.0, %v210
    %v212 = vpop.f32.mrb[0].mxu0
    %v213 = vpop.f32.mrb[0].mxu0
    %v214 = vadd.f32 0.0, %v213
    %v215 = vpop.f32.mrb[0].mxu0
    %216 = vmatprep.mubr.bf16.mxu0 0
    %217 = vmatmul.mubr.bf16.gmra.mrb[0].mxu0 %v109
    %v218 = vpop.f32.mrb[0].mxu0
    %v219 = vadd.f32 0.0, %v218
    %v220 = vpop.f32.mrb[0].mxu0
    %v221 = vpop.f32.mrb[0].mxu0
    %v222 = vadd.f32 0.0, %v221
    %v223 = vpop.f32.mrb[0].mxu0
    %224 = vmatprep.mubr.bf16.mxu0 0
    %225 = vmatmul.mubr.bf16.gmra.mrb[0].mxu0 %v110
    %v226 = vpop.f32.mrb[0].mxu0
    %v227 = vadd.f32 0.0, %v226
    %v228 = vpop.f32.mrb[0].mxu0
    %v229 = vpop.f32.mrb[0].mxu0
    %v230 = vadd.f32 0.0, %v229
    %v231 = vpop.f32.mrb[0].mxu0
    %232 = vdwg.mxu0
    %v249 = vunpack.c.l.b16 %v92
    %v250 = vunpack.c.l.b16 %v93
    %v251 = vunpack.c.l.b16 %v94
    %v252 = vunpack.c.l.b16 %v95
    %v253 = vunpack.c.l.b16 %v96
    %v254 = vunpack.c.l.b16 %v97
    %v255 = vunpack.c.l.b16 %v98
    %v256 = vunpack.c.l.b16 %v99
    %v257 = vunpack.c.l.b16 %v100
    %v258 = vunpack.c.l.b16 %v101
    %v259 = vunpack.c.l.b16 %v102
    %v260 = vunpack.c.l.b16 %v103
    %v261 = vunpack.c.l.b16 %v104
    %v262 = vunpack.c.l.b16 %v105
    %v263 = vunpack.c.l.b16 %v106
    %v264 = vunpack.c.l.b16 %v107
    %v265 = vpack.c.b16 %v250, %v249
    %v266 = vpack.c.b16 %v252, %v251
    %v267 = vpack.c.b16 %v254, %v253
    %v268 = vpack.c.b16 %v256, %v255
    %v269 = vpack.c.b16 %v258, %v257
    %v270 = vpack.c.b16 %v260, %v259
    %v271 = vpack.c.b16 %v262, %v261
    %v272 = vpack.c.b16 %v264, %v263
    %281 = vmatprep.subr.bf16.mxu0 0
    %282 = vmatpush1.bf16.msra.mxu0 %v265
    %283 = vmatprep.subr.bf16.mxu0 0
    %284 = vmatpush1.bf16.msra.mxu0 %v266
    %285 = vmatprep.subr.bf16.mxu0 0
    %286 = vmatpush1.bf16.msra.mxu0 %v267
    %287 = vmatprep.subr.bf16.mxu0 0
    %288 = vmatpush1.bf16.msra.mxu0 %v268
    %289 = vmatprep.subr.bf16.mxu0 0
    %290 = vmatpush1.bf16.msra.mxu0 %v269
    %291 = vmatprep.subr.bf16.mxu0 0
    %292 = vmatpush1.bf16.msra.mxu0 %v270
    %293 = vmatprep.subr.bf16.mxu0 0
    %294 = vmatpush1.bf16.msra.mxu0 %v271
    %295 = vmatprep.subr.bf16.mxu0 0
    %296 = vmatpush1.bf16.msra.mxu0 %v272
    %297 = vmatprep.subr.bf16.mxu0 0
    %298 = vmatpush1.bf16.msra.mxu0 0
    %299 = vmatprep.subr.bf16.mxu0 0
    %300 = vmatpush1.bf16.msra.mxu0 0
    %301 = vmatprep.subr.bf16.mxu0 0
    %302 = vmatpush1.bf16.msra.mxu0 0
    %303 = vmatprep.subr.bf16.mxu0 0
    %304 = vmatpush1.bf16.msra.mxu0 0
    %305 = vmatprep.subr.bf16.mxu0 0
    %306 = vmatpush1.bf16.msra.mxu0 0
    %307 = vmatprep.subr.bf16.mxu0 0
    %308 = vmatpush1.bf16.msra.mxu0 0
    %309 = vmatprep.subr.bf16.mxu0 0
    %310 = vmatpush1.bf16.msra.mxu0 0
    %311 = vmatprep.subr.bf16.mxu0 0
    %312 = vmatpush1.bf16.msra.mxu0 0
    %313 = vmatprep.mubr.bf16.mxu0 0
    %314 = vmatmul.mubr.bf16.gmra.mrb[0].mxu0 %v89
    %v315 = vpop.f32.mrb[0].mxu0
    %v316 = vadd.f32 %v211, %v315
    %v317 = vpop.f32.mrb[0].mxu0
    %v318 = vpop.f32.mrb[0].mxu0
    %v319 = vadd.f32 %v214, %v318
    %v320 = vpop.f32.mrb[0].mxu0
    %321 = vmatprep.mubr.bf16.mxu0 0
    %322 = vmatmul.mubr.bf16.gmra.mrb[0].mxu0 %v90
    %v323 = vpop.f32.mrb[0].mxu0
    %v324 = vadd.f32 %v219, %v323
    %v325 = vpop.f32.mrb[0].mxu0
    %v326 = vpop.f32.mrb[0].mxu0
    %v327 = vadd.f32 %v222, %v326
    %v328 = vpop.f32.mrb[0].mxu0
    %329 = vmatprep.mubr.bf16.mxu0 0
    %330 = vmatmul.mubr.bf16.gmra.mrb[0].mxu0 %v91
    %v331 = vpop.f32.mrb[0].mxu0
    %v332 = vadd.f32 %v227, %v331
    %v333 = vpop.f32.mrb[0].mxu0
    %v334 = vpop.f32.mrb[0].mxu0
    %v335 = vadd.f32 %v230, %v334
    %v336 = vpop.f32.mrb[0].mxu0
    %337 = vdwg.mxu0
    %v338 = vrot.slane %v68, 1
    %v339 = vrot.slane %v69, 1
    %v340 = vrot.slane %v70, 1
    %v341 = vrot.slane %v71, 1
    %v342 = vrot.slane %v72, 1
    %v343 = vrot.slane %v73, 1
    %vm344 = vcmp.lt.s32.totalorder %v81, 7
    %v345 = vsel %vm344, %v342, %v343
    %v346 = vsel %vm344, %v341, %v342
    %v347 = vsel %vm344, %v340, %v341
    %v348 = vsel %vm344, %v339, %v340
    %v349 = vsel %vm344, %v338, %v339
    %v350 = vsel %vm344, %v343, %v338
    %v351 = vpack.c.bf16 %v348, %v349
    %v352 = vpack.c.bf16 %v346, %v347
    %v353 = vpack.c.bf16 %v350, %v345
    %s354 = scalar_lea.vmem [#allocation4], 128
    %v355 = vld [vmem:[%s354] sm:$0xf]
    %v356 = vld [vmem:[%s354 + $0x4] sm:$0xf]
    %v357 = vld [vmem:[%s354 + $0x8] sm:$0xf]
    %v358 = vld [vmem:[%s354 + $0xc] sm:$0xf]
    %v359 = vld [vmem:[%s354 + $0x10] sm:$0xf]
    %v360 = vld [vmem:[%s354 + $0x14] sm:$0xf]
    %v361 = vld [vmem:[%s354 + $0x18] sm:$0xf]
    %v362 = vld [vmem:[%s354 + $0x1c] sm:$0xf]
    %v363 = vld [vmem:[%s354 + $0x20] sm:$0xf]
    %v364 = vld [vmem:[%s354 + $0x24] sm:$0xf]
    %v365 = vld [vmem:[%s354 + $0x28] sm:$0xf]
    %v366 = vld [vmem:[%s354 + $0x2c] sm:$0xf]
    %v367 = vld [vmem:[%s354 + $0x30] sm:$0xf]
    %v368 = vld [vmem:[%s354 + $0x34] sm:$0xf]
    %v369 = vld [vmem:[%s354 + $0x38] sm:$0xf]
    %v370 = vld [vmem:[%s354 + $0x3c] sm:$0xf]
    %v387 = vunpack.c.l.b16 %v355
    %v388 = vunpack.c.l.b16 %v356
    %v389 = vunpack.c.l.b16 %v357
    %v390 = vunpack.c.l.b16 %v358
    %v391 = vunpack.c.l.b16 %v359
    %v392 = vunpack.c.l.b16 %v360
    %v393 = vunpack.c.l.b16 %v361
    %v394 = vunpack.c.l.b16 %v362
    %v395 = vunpack.c.l.b16 %v363
    %v396 = vunpack.c.l.b16 %v364
    %v397 = vunpack.c.l.b16 %v365
    %v398 = vunpack.c.l.b16 %v366
    %v399 = vunpack.c.l.b16 %v367
    %v400 = vunpack.c.l.b16 %v368
    %v401 = vunpack.c.l.b16 %v369
    %v402 = vunpack.c.l.b16 %v370
    %v403 = vpack.c.b16 %v388, %v387
    %v404 = vpack.c.b16 %v390, %v389
    %v405 = vpack.c.b16 %v392, %v391
    %v406 = vpack.c.b16 %v394, %v393
    %v407 = vpack.c.b16 %v396, %v395
    %v408 = vpack.c.b16 %v398, %v397
    %v409 = vpack.c.b16 %v400, %v399
    %v410 = vpack.c.b16 %v402, %v401
    %419 = vmatprep.subr.bf16.mxu0 0
    %420 = vmatpush1.bf16.msra.mxu0 %v403
    %421 = vmatprep.subr.bf16.mxu0 0
    %422 = vmatpush1.bf16.msra.mxu0 %v404
    %423 = vmatprep.subr.bf16.mxu0 0
    %424 = vmatpush1.bf16.msra.mxu0 %v405
    %425 = vmatprep.subr.bf16.mxu0 0
    %426 = vmatpush1.bf16.msra.mxu0 %v406
    %427 = vmatprep.subr.bf16.mxu0 0
    %428 = vmatpush1.bf16.msra.mxu0 %v407
    %429 = vmatprep.subr.bf16.mxu0 0
    %430 = vmatpush1.bf16.msra.mxu0 %v408
    %431 = vmatprep.subr.bf16.mxu0 0
    %432 = vmatpush1.bf16.msra.mxu0 %v409
    %433 = vmatprep.subr.bf16.mxu0 0
    %434 = vmatpush1.bf16.msra.mxu0 %v410
    %435 = vmatprep.subr.bf16.mxu0 0
    %436 = vmatpush1.bf16.msra.mxu0 0
    %437 = vmatprep.subr.bf16.mxu0 0
    %438 = vmatpush1.bf16.msra.mxu0 0
    %439 = vmatprep.subr.bf16.mxu0 0
    %440 = vmatpush1.bf16.msra.mxu0 0
    %441 = vmatprep.subr.bf16.mxu0 0
    %442 = vmatpush1.bf16.msra.mxu0 0
    %443 = vmatprep.subr.bf16.mxu0 0
    %444 = vmatpush1.bf16.msra.mxu0 0
    %445 = vmatprep.subr.bf16.mxu0 0
    %446 = vmatpush1.bf16.msra.mxu0 0
    %447 = vmatprep.subr.bf16.mxu0 0
    %448 = vmatpush1.bf16.msra.mxu0 0
    %449 = vmatprep.subr.bf16.mxu0 0
    %450 = vmatpush1.bf16.msra.mxu0 0
    %451 = vmatprep.mubr.bf16.mxu0 0
    %452 = vmatmul.mubr.bf16.gmra.mrb[0].mxu0 %v351
    %v453 = vpop.f32.mrb[0].mxu0
    %v454 = vadd.f32 0.0, %v453
    %v455 = vpop.f32.mrb[0].mxu0
    %v456 = vpop.f32.mrb[0].mxu0
    %v457 = vadd.f32 0.0, %v456
    %v458 = vpop.f32.mrb[0].mxu0
    %459 = vmatprep.mubr.bf16.mxu0 0
    %460 = vmatmul.mubr.bf16.gmra.mrb[0].mxu0 %v352
    %v461 = vpop.f32.mrb[0].mxu0
    %v462 = vadd.f32 0.0, %v461
    %v463 = vpop.f32.mrb[0].mxu0
    %v464 = vpop.f32.mrb[0].mxu0
    %v465 = vadd.f32 0.0, %v464
    %v466 = vpop.f32.mrb[0].mxu0
    %467 = vmatprep.mubr.bf16.mxu0 0
    %468 = vmatmul.mubr.bf16.gmra.mrb[0].mxu0 %v353
    %v469 = vpop.f32.mrb[0].mxu0
    %v470 = vadd.f32 0.0, %v469
    %v471 = vpop.f32.mrb[0].mxu0
    %v472 = vpop.f32.mrb[0].mxu0
    %v473 = vadd.f32 0.0, %v472
    %v474 = vpop.f32.mrb[0].mxu0
    %475 = vdwg.mxu0
    %v476 = vadd.f32 %v316, %v454
    %v477 = vadd.f32 %v319, %v457
    %v478 = vadd.f32 %v324, %v462
    %v479 = vadd.f32 %v327, %v465
    %v480 = vadd.f32 %v332, %v470
    %v481 = vadd.f32 %v335, %v473
    %v482 = vld [vmem:[%s3] sm:$0x1]
    %v483 = vlaneseq
    %v484 = vshrl.u32 %v483, 7
    %v485 = vsub.s32 0, %v484
    %v486 = vrot.slane %v482, %v485
    %v487 = vadd.f32 %v476, %v486
    %v488 = vadd.f32 %v477, %v486
    %v489 = vadd.f32 %v478, %v486
    %v490 = vadd.f32 %v479, %v486
    %v491 = vadd.f32 %v480, %v486
    %v492 = vadd.f32 %v481, %v486
    %v493 = vld [vmem:[%s3 + $0x1] sm:$0x1]
    %v494 = vld [vmem:[%s3 + $0x2] sm:$0x1]
    %495 = vadd.xlane.f32.xlu0 %v487
    %v496 = vpop.xlane.xlu0 %495
    %497 = vadd.xlane.f32.xlu0 %v488
    %v498 = vpop.xlane.xlu0 %497
    %499 = vadd.xlane.f32.xlu0 %v489
    %v500 = vpop.xlane.xlu0 %499
    %501 = vadd.xlane.f32.xlu0 %v490
    %v502 = vpop.xlane.xlu0 %501
    %503 = vadd.xlane.f32.xlu0 %v491
    %v504 = vpop.xlane.xlu0 %503
    %505 = vadd.xlane.f32.xlu0 %v492
    %v506 = vpop.xlane.xlu0 %505
    %v507 = vmul.f32 %v496, 0.0078125
    %v508 = vmul.f32 %v498, 0.0078125
    %v509 = vmul.f32 %v500, 0.0078125
    %v510 = vmul.f32 %v502, 0.0078125
    %v511 = vmul.f32 %v504, 0.0078125
    %v512 = vmul.f32 %v506, 0.0078125
    %v513 = vmul.f32 %v487, %v487
    %v514 = vmul.f32 %v488, %v488
    %v515 = vmul.f32 %v489, %v489
    %v516 = vmul.f32 %v490, %v490
    %v517 = vmul.f32 %v491, %v491
    %v518 = vmul.f32 %v492, %v492
    %519 = vadd.xlane.f32.xlu0 %v513
    %v520 = vpop.xlane.xlu0 %519
    %521 = vadd.xlane.f32.xlu0 %v514
    %v522 = vpop.xlane.xlu0 %521
    %523 = vadd.xlane.f32.xlu0 %v515
    %v524 = vpop.xlane.xlu0 %523
    %525 = vadd.xlane.f32.xlu0 %v516
    %v526 = vpop.xlane.xlu0 %525
    %527 = vadd.xlane.f32.xlu0 %v517
    %v528 = vpop.xlane.xlu0 %527
    %529 = vadd.xlane.f32.xlu0 %v518
    %v530 = vpop.xlane.xlu0 %529
    %v531 = vmul.f32 %v520, 0.0078125
    %v532 = vmul.f32 %v522, 0.0078125
    %v533 = vmul.f32 %v524, 0.0078125
    %v534 = vmul.f32 %v526, 0.0078125
    %v535 = vmul.f32 %v528, 0.0078125
    %v536 = vmul.f32 %v530, 0.0078125
    %v537 = vmul.f32 %v507, %v507
    %v538 = vmul.f32 %v508, %v508
    %v539 = vmul.f32 %v509, %v509
    %v540 = vmul.f32 %v510, %v510
    %v541 = vmul.f32 %v511, %v511
    %v542 = vmul.f32 %v512, %v512
    %v543 = vsub.f32 %v531, %v537
    %v544 = vsub.f32 %v532, %v538
    %v545 = vsub.f32 %v533, %v539
    %v546 = vsub.f32 %v534, %v540
    %v547 = vsub.f32 %v535, %v541
    %v548 = vsub.f32 %v536, %v542
    %v549 = vadd.f32 %v543, 1e-05
    %v550 = vadd.f32 %v544, 1e-05
    %v551 = vadd.f32 %v545, 1e-05
    %v552 = vadd.f32 %v546, 1e-05
    %v553 = vadd.f32 %v547, 1e-05
    %v554 = vadd.f32 %v548, 1e-05
    %v555 = vrsqrt.pop %v549
    %v556 = vrsqrt.pop %v550
    %v557 = vrsqrt.pop %v551
    %v558 = vrsqrt.pop %v552
    %v559 = vrsqrt.pop %v553
    %v560 = vrsqrt.pop %v554
    %v561 = vlaneseq
    %v562 = vshrl.u32 %v561, 7
    %v563 = vsub.s32 0, %v562
    %v564 = vrot.slane %v493, %v563
    %v565 = vmul.f32 %v564, %v555
    %v566 = vmul.f32 %v564, %v556
    %v567 = vmul.f32 %v564, %v557
    %v568 = vmul.f32 %v564, %v558
    %v569 = vmul.f32 %v564, %v559
    %v570 = vmul.f32 %v564, %v560
    %v571 = vsub.f32 %v487, %v507
    %v572 = vsub.f32 %v488, %v508
    %v573 = vsub.f32 %v489, %v509
    %v574 = vsub.f32 %v490, %v510
    %v575 = vsub.f32 %v491, %v511
    %v576 = vsub.f32 %v492, %v512
    %v577 = vmul.f32 %v571, %v565
    %v578 = vmul.f32 %v572, %v566
    %v579 = vmul.f32 %v573, %v567
    %v580 = vmul.f32 %v574, %v568
    %v581 = vmul.f32 %v575, %v569
    %v582 = vmul.f32 %v576, %v570
    %v583 = vlaneseq
    %v584 = vshrl.u32 %v583, 7
    %v585 = vsub.s32 0, %v584
    %v586 = vrot.slane %v494, %v585
    %v587 = vadd.f32 %v577, %v586
    %v588 = vadd.f32 %v578, %v586
    %v589 = vadd.f32 %v579, %v586
    %v590 = vadd.f32 %v580, %v586
    %v591 = vadd.f32 %v581, %v586
    %v592 = vadd.f32 %v582, %v586
    %v593 = vmax.f32 %v587, 0.0
    %v594 = vmax.f32 %v588, 0.0
    %v595 = vmax.f32 %v589, 0.0
    %v596 = vmax.f32 %v590, 0.0
    %v597 = vmax.f32 %v591, 0.0
    %v598 = vmax.f32 %v592, 0.0
    %v599 = vld [vmem:[%s4] sm:$0xff]
    %v600 = vld [vmem:[%s4 + $0x8] sm:$0xff]
    %v601 = vld [vmem:[%s4 + $0x10] sm:$0xff]
    %v602 = vld [vmem:[%s4 + $0x18] sm:$0xff]
    %v603 = vld [vmem:[%s4 + $0x20] sm:$0xff]
    %v604 = vld [vmem:[%s4 + $0x28] sm:$0xff]
    %vm605 = vcmp.gt.f32.partialorder %v599, 0.5
    %vm606 = vcmp.gt.f32.partialorder %v600, 0.5
    %vm607 = vcmp.gt.f32.partialorder %v601, 0.5
    %vm608 = vcmp.gt.f32.partialorder %v602, 0.5
    %vm609 = vcmp.gt.f32.partialorder %v603, 0.5
    %vm610 = vcmp.gt.f32.partialorder %v604, 0.5
    %v611 = vsel %vm605, 1, 0
    %v612 = vsel %vm606, 1, 0
    %v613 = vsel %vm607, 1, 0
    %v614 = vsel %vm608, 1, 0
    %v615 = vsel %vm609, 1, 0
    %v616 = vsel %vm610, 1, 0
    %617 = vset.pattern.permute.xlu0 0
    %618 = vperm.xlu0 %617, %v611
    %v619 = vpop.permute.xlu0 %618
    %620 = vset.pattern.permute.xlu0 0
    %621 = vperm.xlu0 %620, %v612
    %v622 = vpop.permute.xlu0 %621
    %623 = vset.pattern.permute.xlu0 0
    %624 = vperm.xlu0 %623, %v613
    %v625 = vpop.permute.xlu0 %624
    %626 = vset.pattern.permute.xlu0 0
    %627 = vperm.xlu0 %626, %v614
    %v628 = vpop.permute.xlu0 %627
    %629 = vset.pattern.permute.xlu0 0
    %630 = vperm.xlu0 %629, %v615
    %v631 = vpop.permute.xlu0 %630
    %632 = vset.pattern.permute.xlu0 0
    %633 = vperm.xlu0 %632, %v616
    %v634 = vpop.permute.xlu0 %633
    %vm635 = vcmp.eq.s32.totalorder %v619, 1
    %vm636 = vcmp.eq.s32.totalorder %v622, 1
    %vm637 = vcmp.eq.s32.totalorder %v625, 1
    %vm638 = vcmp.eq.s32.totalorder %v628, 1
    %vm639 = vcmp.eq.s32.totalorder %v631, 1
    %vm640 = vcmp.eq.s32.totalorder %v634, 1
    %v641 = vsel %vm635, %v593, 0.0
    %v642 = vsel %vm636, %v594, 0.0
    %v643 = vsel %vm637, %v595, 0.0
    %v644 = vsel %vm638, %v596, 0.0
    %v645 = vsel %vm639, %v597, 0.0
    %v646 = vsel %vm640, %v598, 0.0
    %v647 = vrot.slane %v641, 7
    %v648 = vrot.slane %v642, 7
    %v649 = vrot.slane %v643, 7
    %v650 = vrot.slane %v644, 7
    %v651 = vrot.slane %v645, 7
    %v652 = vrot.slane %v646, 7
    %v653 = vsel %vm82, %v651, %v652
    %v654 = vsel %vm82, %v650, %v651
    %v655 = vsel %vm82, %v649, %v650
    %v656 = vsel %vm82, %v648, %v649
    %v657 = vsel %vm82, %v647, %v648
    %v658 = vsel %vm82, %v652, %v647
    %v659 = vpack.c.bf16 %v657, %v658
    %v660 = vpack.c.bf16 %v655, %v656
    %v661 = vpack.c.bf16 %v653, %v654
    %v662 = vld [vmem:[#allocation6] sm:$0xf]
    %v663 = vld [vmem:[#allocation6 + $0x4] sm:$0xf]
    %v664 = vld [vmem:[#allocation6 + $0x8] sm:$0xf]
    %v665 = vld [vmem:[#allocation6 + $0xc] sm:$0xf]
    %v666 = vld [vmem:[#allocation6 + $0x10] sm:$0xf]
    %v667 = vld [vmem:[#allocation6 + $0x14] sm:$0xf]
    %v668 = vld [vmem:[#allocation6 + $0x18] sm:$0xf]
    %v669 = vld [vmem:[#allocation6 + $0x1c] sm:$0xf]
    %v670 = vld [vmem:[#allocation6 + $0x20] sm:$0xf]
    %v671 = vld [vmem:[#allocation6 + $0x24] sm:$0xf]
    %v672 = vld [vmem:[#allocation6 + $0x28] sm:$0xf]
    %v673 = vld [vmem:[#allocation6 + $0x2c] sm:$0xf]
    %v674 = vld [vmem:[#allocation6 + $0x30] sm:$0xf]
    %v675 = vld [vmem:[#allocation6 + $0x34] sm:$0xf]
    %v676 = vld [vmem:[#allocation6 + $0x38] sm:$0xf]
    %v677 = vld [vmem:[#allocation6 + $0x3c] sm:$0xf]
    %v678 = vpack.c.bf16 %v642, %v641
    %v679 = vpack.c.bf16 %v644, %v643
    %v680 = vpack.c.bf16 %v646, %v645
    %s681 = scalar_lea.vmem [#allocation6], 64
    %v682 = vld [vmem:[%s681] sm:$0xf]
    %v683 = vld [vmem:[%s681 + $0x4] sm:$0xf]
    %v684 = vld [vmem:[%s681 + $0x8] sm:$0xf]
    %v685 = vld [vmem:[%s681 + $0xc] sm:$0xf]
    %v686 = vld [vmem:[%s681 + $0x10] sm:$0xf]
    %v687 = vld [vmem:[%s681 + $0x14] sm:$0xf]
    %v688 = vld [vmem:[%s681 + $0x18] sm:$0xf]
    %v689 = vld [vmem:[%s681 + $0x1c] sm:$0xf]
    %v690 = vld [vmem:[%s681 + $0x20] sm:$0xf]
    %v691 = vld [vmem:[%s681 + $0x24] sm:$0xf]
    %v692 = vld [vmem:[%s681 + $0x28] sm:$0xf]
    %v693 = vld [vmem:[%s681 + $0x2c] sm:$0xf]
    %v694 = vld [vmem:[%s681 + $0x30] sm:$0xf]
    %v695 = vld [vmem:[%s681 + $0x34] sm:$0xf]
    %v696 = vld [vmem:[%s681 + $0x38] sm:$0xf]
    %v697 = vld [vmem:[%s681 + $0x3c] sm:$0xf]
    %v714 = vunpack.c.l.b16 %v682
    %v715 = vunpack.c.l.b16 %v683
    %v716 = vunpack.c.l.b16 %v684
    %v717 = vunpack.c.l.b16 %v685
    %v718 = vunpack.c.l.b16 %v686
    %v719 = vunpack.c.l.b16 %v687
    %v720 = vunpack.c.l.b16 %v688
    %v721 = vunpack.c.l.b16 %v689
    %v722 = vunpack.c.l.b16 %v690
    %v723 = vunpack.c.l.b16 %v691
    %v724 = vunpack.c.l.b16 %v692
    %v725 = vunpack.c.l.b16 %v693
    %v726 = vunpack.c.l.b16 %v694
    %v727 = vunpack.c.l.b16 %v695
    %v728 = vunpack.c.l.b16 %v696
    %v729 = vunpack.c.l.b16 %v697
    %v730 = vpack.c.b16 %v715, %v714
    %v731 = vpack.c.b16 %v717, %v716
    %v732 = vpack.c.b16 %v719, %v718
    %v733 = vpack.c.b16 %v721, %v720
    %v734 = vpack.c.b16 %v723, %v722
    %v735 = vpack.c.b16 %v725, %v724
    %v736 = vpack.c.b16 %v727, %v726
    %v737 = vpack.c.b16 %v729, %v728
    %746 = vmatprep.subr.bf16.mxu0 0
    %747 = vmatpush1.bf16.msra.mxu0 %v730
    %748 = vmatprep.subr.bf16.mxu0 0
    %749 = vmatpush1.bf16.msra.mxu0 %v731
    %750 = vmatprep.subr.bf16.mxu0 0
    %751 = vmatpush1.bf16.msra.mxu0 %v732
    %752 = vmatprep.subr.bf16.mxu0 0
    %753 = vmatpush1.bf16.msra.mxu0 %v733
    %754 = vmatprep.subr.bf16.mxu0 0
    %755 = vmatpush1.bf16.msra.mxu0 %v734
    %756 = vmatprep.subr.bf16.mxu0 0
    %757 = vmatpush1.bf16.msra.mxu0 %v735
    %758 = vmatprep.subr.bf16.mxu0 0
    %759 = vmatpush1.bf16.msra.mxu0 %v736
    %760 = vmatprep.subr.bf16.mxu0 0
    %761 = vmatpush1.bf16.msra.mxu0 %v737
    %762 = vmatprep.subr.bf16.mxu0 0
    %763 = vmatpush1.bf16.msra.mxu0 0
    %764 = vmatprep.subr.bf16.mxu0 0
    %765 = vmatpush1.bf16.msra.mxu0 0
    %766 = vmatprep.subr.bf16.mxu0 0
    %767 = vmatpush1.bf16.msra.mxu0 0
    %768 = vmatprep.subr.bf16.mxu0 0
    %769 = vmatpush1.bf16.msra.mxu0 0
    %770 = vmatprep.subr.bf16.mxu0 0
    %771 = vmatpush1.bf16.msra.mxu0 0
    %772 = vmatprep.subr.bf16.mxu0 0
    %773 = vmatpush1.bf16.msra.mxu0 0
    %774 = vmatprep.subr.bf16.mxu0 0
    %775 = vmatpush1.bf16.msra.mxu0 0
    %776 = vmatprep.subr.bf16.mxu0 0
    %777 = vmatpush1.bf16.msra.mxu0 0
    %778 = vmatprep.mubr.bf16.mxu0 0
    %779 = vmatmul.mubr.bf16.gmra.mrb[0].mxu0 %v678
    %v780 = vpop.f32.mrb[0].mxu0
    %v781 = vadd.f32 0.0, %v780
    %v782 = vpop.f32.mrb[0].mxu0
    %v783 = vpop.f32.mrb[0].mxu0
    %v784 = vadd.f32 0.0, %v783
    %v785 = vpop.f32.mrb[0].mxu0
    %786 = vmatprep.mubr.bf16.mxu0 0
    %787 = vmatmul.mubr.bf16.gmra.mrb[0].mxu0 %v679
    %v788 = vpop.f32.mrb[0].mxu0
    %v789 = vadd.f32 0.0, %v788
    %v790 = vpop.f32.mrb[0].mxu0
    %v791 = vpop.f32.mrb[0].mxu0
    %v792 = vadd.f32 0.0, %v791
    %v793 = vpop.f32.mrb[0].mxu0
    %794 = vmatprep.mubr.bf16.mxu0 0
    %795 = vmatmul.mubr.bf16.gmra.mrb[0].mxu0 %v680
    %v796 = vpop.f32.mrb[0].mxu0
    %v797 = vadd.f32 0.0, %v796
    %v798 = vpop.f32.mrb[0].mxu0
    %v799 = vpop.f32.mrb[0].mxu0
    %v800 = vadd.f32 0.0, %v799
    %v801 = vpop.f32.mrb[0].mxu0
    %802 = vdwg.mxu0
    %v819 = vunpack.c.l.b16 %v662
    %v820 = vunpack.c.l.b16 %v663
    %v821 = vunpack.c.l.b16 %v664
    %v822 = vunpack.c.l.b16 %v665
    %v823 = vunpack.c.l.b16 %v666
    %v824 = vunpack.c.l.b16 %v667
    %v825 = vunpack.c.l.b16 %v668
    %v826 = vunpack.c.l.b16 %v669
    %v827 = vunpack.c.l.b16 %v670
    %v828 = vunpack.c.l.b16 %v671
    %v829 = vunpack.c.l.b16 %v672
    %v830 = vunpack.c.l.b16 %v673
    %v831 = vunpack.c.l.b16 %v674
    %v832 = vunpack.c.l.b16 %v675
    %v833 = vunpack.c.l.b16 %v676
    %v834 = vunpack.c.l.b16 %v677
    %v835 = vpack.c.b16 %v820, %v819
    %v836 = vpack.c.b16 %v822, %v821
    %v837 = vpack.c.b16 %v824, %v823
    %v838 = vpack.c.b16 %v826, %v825
    %v839 = vpack.c.b16 %v828, %v827
    %v840 = vpack.c.b16 %v830, %v829
    %v841 = vpack.c.b16 %v832, %v831
    %v842 = vpack.c.b16 %v834, %v833
    %851 = vmatprep.subr.bf16.mxu0 0
    %852 = vmatpush1.bf16.msra.mxu0 %v835
    %853 = vmatprep.subr.bf16.mxu0 0
    %854 = vmatpush1.bf16.msra.mxu0 %v836
    %855 = vmatprep.subr.bf16.mxu0 0
    %856 = vmatpush1.bf16.msra.mxu0 %v837
    %857 = vmatprep.subr.bf16.mxu0 0
    %858 = vmatpush1.bf16.msra.mxu0 %v838
    %859 = vmatprep.subr.bf16.mxu0 0
    %860 = vmatpush1.bf16.msra.mxu0 %v839
    %861 = vmatprep.subr.bf16.mxu0 0
    %862 = vmatpush1.bf16.msra.mxu0 %v840
    %863 = vmatprep.subr.bf16.mxu0 0
    %864 = vmatpush1.bf16.msra.mxu0 %v841
    %865 = vmatprep.subr.bf16.mxu0 0
    %866 = vmatpush1.bf16.msra.mxu0 %v842
    %867 = vmatprep.subr.bf16.mxu0 0
    %868 = vmatpush1.bf16.msra.mxu0 0
    %869 = vmatprep.subr.bf16.mxu0 0
    %870 = vmatpush1.bf16.msra.mxu0 0
    %871 = vmatprep.subr.bf16.mxu0 0
    %872 = vmatpush1.bf16.msra.mxu0 0
    %873 = vmatprep.subr.bf16.mxu0 0
    %874 = vmatpush1.bf16.msra.mxu0 0
    %875 = vmatprep.subr.bf16.mxu0 0
    %876 = vmatpush1.bf16.msra.mxu0 0
    %877 = vmatprep.subr.bf16.mxu0 0
    %878 = vmatpush1.bf16.msra.mxu0 0
    %879 = vmatprep.subr.bf16.mxu0 0
    %880 = vmatpush1.bf16.msra.mxu0 0
    %881 = vmatprep.subr.bf16.mxu0 0
    %882 = vmatpush1.bf16.msra.mxu0 0
    %883 = vmatprep.mubr.bf16.mxu0 0
    %884 = vmatmul.mubr.bf16.gmra.mrb[0].mxu0 %v659
    %v885 = vpop.f32.mrb[0].mxu0
    %v886 = vadd.f32 %v781, %v885
    %v887 = vpop.f32.mrb[0].mxu0
    %v888 = vpop.f32.mrb[0].mxu0
    %v889 = vadd.f32 %v784, %v888
    %v890 = vpop.f32.mrb[0].mxu0
    %891 = vmatprep.mubr.bf16.mxu0 0
    %892 = vmatmul.mubr.bf16.gmra.mrb[0].mxu0 %v660
    %v893 = vpop.f32.mrb[0].mxu0
    %v894 = vadd.f32 %v789, %v893
    %v895 = vpop.f32.mrb[0].mxu0
    %v896 = vpop.f32.mrb[0].mxu0
    %v897 = vadd.f32 %v792, %v896
    %v898 = vpop.f32.mrb[0].mxu0
    %899 = vmatprep.mubr.bf16.mxu0 0
    %900 = vmatmul.mubr.bf16.gmra.mrb[0].mxu0 %v661
    %v901 = vpop.f32.mrb[0].mxu0
    %v902 = vadd.f32 %v797, %v901
    %v903 = vpop.f32.mrb[0].mxu0
    %v904 = vpop.f32.mrb[0].mxu0
    %v905 = vadd.f32 %v800, %v904
    %v906 = vpop.f32.mrb[0].mxu0
    %907 = vdwg.mxu0
    %v908 = vrot.slane %v641, 1
    %v909 = vrot.slane %v642, 1
    %v910 = vrot.slane %v643, 1
    %v911 = vrot.slane %v644, 1
    %v912 = vrot.slane %v645, 1
    %v913 = vrot.slane %v646, 1
    %v914 = vsel %vm344, %v912, %v913
    %v915 = vsel %vm344, %v911, %v912
    %v916 = vsel %vm344, %v910, %v911
    %v917 = vsel %vm344, %v909, %v910
    %v918 = vsel %vm344, %v908, %v909
    %v919 = vsel %vm344, %v913, %v908
    %v920 = vpack.c.bf16 %v917, %v918
    %v921 = vpack.c.bf16 %v915, %v916
    %v922 = vpack.c.bf16 %v919, %v914
    %s923 = scalar_lea.vmem [#allocation6], 128
    %v924 = vld [vmem:[%s923] sm:$0xf]
    %v925 = vld [vmem:[%s923 + $0x4] sm:$0xf]
    %v926 = vld [vmem:[%s923 + $0x8] sm:$0xf]
    %v927 = vld [vmem:[%s923 + $0xc] sm:$0xf]
    %v928 = vld [vmem:[%s923 + $0x10] sm:$0xf]
    %v929 = vld [vmem:[%s923 + $0x14] sm:$0xf]
    %v930 = vld [vmem:[%s923 + $0x18] sm:$0xf]
    %v931 = vld [vmem:[%s923 + $0x1c] sm:$0xf]
    %v932 = vld [vmem:[%s923 + $0x20] sm:$0xf]
    %v933 = vld [vmem:[%s923 + $0x24] sm:$0xf]
    %v934 = vld [vmem:[%s923 + $0x28] sm:$0xf]
    %v935 = vld [vmem:[%s923 + $0x2c] sm:$0xf]
    %v936 = vld [vmem:[%s923 + $0x30] sm:$0xf]
    %v937 = vld [vmem:[%s923 + $0x34] sm:$0xf]
    %v938 = vld [vmem:[%s923 + $0x38] sm:$0xf]
    %v939 = vld [vmem:[%s923 + $0x3c] sm:$0xf]
    %v956 = vunpack.c.l.b16 %v924
    %v957 = vunpack.c.l.b16 %v925
    %v958 = vunpack.c.l.b16 %v926
    %v959 = vunpack.c.l.b16 %v927
    %v960 = vunpack.c.l.b16 %v928
    %v961 = vunpack.c.l.b16 %v929
    %v962 = vunpack.c.l.b16 %v930
    %v963 = vunpack.c.l.b16 %v931
    %v964 = vunpack.c.l.b16 %v932
    %v965 = vunpack.c.l.b16 %v933
    %v966 = vunpack.c.l.b16 %v934
    %v967 = vunpack.c.l.b16 %v935
    %v968 = vunpack.c.l.b16 %v936
    %v969 = vunpack.c.l.b16 %v937
    %v970 = vunpack.c.l.b16 %v938
    %v971 = vunpack.c.l.b16 %v939
    %v972 = vpack.c.b16 %v957, %v956
    %v973 = vpack.c.b16 %v959, %v958
    %v974 = vpack.c.b16 %v961, %v960
    %v975 = vpack.c.b16 %v963, %v962
    %v976 = vpack.c.b16 %v965, %v964
    %v977 = vpack.c.b16 %v967, %v966
    %v978 = vpack.c.b16 %v969, %v968
    %v979 = vpack.c.b16 %v971, %v970
    %988 = vmatprep.subr.bf16.mxu0 0
    %989 = vmatpush1.bf16.msra.mxu0 %v972
    %990 = vmatprep.subr.bf16.mxu0 0
    %991 = vmatpush1.bf16.msra.mxu0 %v973
    %992 = vmatprep.subr.bf16.mxu0 0
    %993 = vmatpush1.bf16.msra.mxu0 %v974
    %994 = vmatprep.subr.bf16.mxu0 0
    %995 = vmatpush1.bf16.msra.mxu0 %v975
    %996 = vmatprep.subr.bf16.mxu0 0
    %997 = vmatpush1.bf16.msra.mxu0 %v976
    %998 = vmatprep.subr.bf16.mxu0 0
    %999 = vmatpush1.bf16.msra.mxu0 %v977
    %1000 = vmatprep.subr.bf16.mxu0 0
    %1001 = vmatpush1.bf16.msra.mxu0 %v978
    %1002 = vmatprep.subr.bf16.mxu0 0
    %1003 = vmatpush1.bf16.msra.mxu0 %v979
    %1004 = vmatprep.subr.bf16.mxu0 0
    %1005 = vmatpush1.bf16.msra.mxu0 0
    %1006 = vmatprep.subr.bf16.mxu0 0
    %1007 = vmatpush1.bf16.msra.mxu0 0
    %1008 = vmatprep.subr.bf16.mxu0 0
    %1009 = vmatpush1.bf16.msra.mxu0 0
    %1010 = vmatprep.subr.bf16.mxu0 0
    %1011 = vmatpush1.bf16.msra.mxu0 0
    %1012 = vmatprep.subr.bf16.mxu0 0
    %1013 = vmatpush1.bf16.msra.mxu0 0
    %1014 = vmatprep.subr.bf16.mxu0 0
    %1015 = vmatpush1.bf16.msra.mxu0 0
    %1016 = vmatprep.subr.bf16.mxu0 0
    %1017 = vmatpush1.bf16.msra.mxu0 0
    %1018 = vmatprep.subr.bf16.mxu0 0
    %1019 = vmatpush1.bf16.msra.mxu0 0
    %1020 = vmatprep.mubr.bf16.mxu0 0
    %1021 = vmatmul.mubr.bf16.gmra.mrb[0].mxu0 %v920
    %v1022 = vpop.f32.mrb[0].mxu0
    %v1023 = vadd.f32 0.0, %v1022
    %v1024 = vpop.f32.mrb[0].mxu0
    %v1025 = vpop.f32.mrb[0].mxu0
    %v1026 = vadd.f32 0.0, %v1025
    %v1027 = vpop.f32.mrb[0].mxu0
    %1028 = vmatprep.mubr.bf16.mxu0 0
    %1029 = vmatmul.mubr.bf16.gmra.mrb[0].mxu0 %v921
    %v1030 = vpop.f32.mrb[0].mxu0
    %v1031 = vadd.f32 0.0, %v1030
    %v1032 = vpop.f32.mrb[0].mxu0
    %v1033 = vpop.f32.mrb[0].mxu0
    %v1034 = vadd.f32 0.0, %v1033
    %v1035 = vpop.f32.mrb[0].mxu0
    %1036 = vmatprep.mubr.bf16.mxu0 0
    %1037 = vmatmul.mubr.bf16.gmra.mrb[0].mxu0 %v922
    %v1038 = vpop.f32.mrb[0].mxu0
    %v1039 = vadd.f32 0.0, %v1038
    %v1040 = vpop.f32.mrb[0].mxu0
    %v1041 = vpop.f32.mrb[0].mxu0
    %v1042 = vadd.f32 0.0, %v1041
    %v1043 = vpop.f32.mrb[0].mxu0
    %1044 = vdwg.mxu0
    %v1045 = vadd.f32 %v886, %v1023
    %v1046 = vadd.f32 %v889, %v1026
    %v1047 = vadd.f32 %v894, %v1031
    %v1048 = vadd.f32 %v897, %v1034
    %v1049 = vadd.f32 %v902, %v1039
    %v1050 = vadd.f32 %v905, %v1042
    %v1051 = vld [vmem:[%s3 + $0x3] sm:$0x1]
    %v1052 = vlaneseq
    %v1053 = vshrl.u32 %v1052, 7
    %v1054 = vsub.s32 0, %v1053
    %v1055 = vrot.slane %v1051, %v1054
    %v1056 = vadd.f32 %v1045, %v1055
    %v1057 = vadd.f32 %v1046, %v1055
    %v1058 = vadd.f32 %v1047, %v1055
    %v1059 = vadd.f32 %v1048, %v1055
    %v1060 = vadd.f32 %v1049, %v1055
    %v1061 = vadd.f32 %v1050, %v1055
    %v1062 = vld [vmem:[%s3 + $0x4] sm:$0x1]
    %v1063 = vld [vmem:[%s3 + $0x5] sm:$0x1]
    %1064 = vadd.xlane.f32.xlu0 %v1056
    %v1065 = vpop.xlane.xlu0 %1064
    %1066 = vadd.xlane.f32.xlu0 %v1057
    %v1067 = vpop.xlane.xlu0 %1066
    %1068 = vadd.xlane.f32.xlu0 %v1058
    %v1069 = vpop.xlane.xlu0 %1068
    %1070 = vadd.xlane.f32.xlu0 %v1059
    %v1071 = vpop.xlane.xlu0 %1070
    %1072 = vadd.xlane.f32.xlu0 %v1060
    %v1073 = vpop.xlane.xlu0 %1072
    %1074 = vadd.xlane.f32.xlu0 %v1061
    %v1075 = vpop.xlane.xlu0 %1074
    %v1076 = vmul.f32 %v1065, 0.0078125
    %v1077 = vmul.f32 %v1067, 0.0078125
    %v1078 = vmul.f32 %v1069, 0.0078125
    %v1079 = vmul.f32 %v1071, 0.0078125
    %v1080 = vmul.f32 %v1073, 0.0078125
    %v1081 = vmul.f32 %v1075, 0.0078125
    %v1082 = vmul.f32 %v1056, %v1056
    %v1083 = vmul.f32 %v1057, %v1057
    %v1084 = vmul.f32 %v1058, %v1058
    %v1085 = vmul.f32 %v1059, %v1059
    %v1086 = vmul.f32 %v1060, %v1060
    %v1087 = vmul.f32 %v1061, %v1061
    %1088 = vadd.xlane.f32.xlu0 %v1082
    %v1089 = vpop.xlane.xlu0 %1088
    %1090 = vadd.xlane.f32.xlu0 %v1083
    %v1091 = vpop.xlane.xlu0 %1090
    %1092 = vadd.xlane.f32.xlu0 %v1084
    %v1093 = vpop.xlane.xlu0 %1092
    %1094 = vadd.xlane.f32.xlu0 %v1085
    %v1095 = vpop.xlane.xlu0 %1094
    %1096 = vadd.xlane.f32.xlu0 %v1086
    %v1097 = vpop.xlane.xlu0 %1096
    %1098 = vadd.xlane.f32.xlu0 %v1087
    %v1099 = vpop.xlane.xlu0 %1098
    %v1100 = vmul.f32 %v1089, 0.0078125
    %v1101 = vmul.f32 %v1091, 0.0078125
    %v1102 = vmul.f32 %v1093, 0.0078125
    %v1103 = vmul.f32 %v1095, 0.0078125
    %v1104 = vmul.f32 %v1097, 0.0078125
    %v1105 = vmul.f32 %v1099, 0.0078125
    %v1106 = vmul.f32 %v1076, %v1076
    %v1107 = vmul.f32 %v1077, %v1077
    %v1108 = vmul.f32 %v1078, %v1078
    %v1109 = vmul.f32 %v1079, %v1079
    %v1110 = vmul.f32 %v1080, %v1080
    %v1111 = vmul.f32 %v1081, %v1081
    %v1112 = vsub.f32 %v1100, %v1106
    %v1113 = vsub.f32 %v1101, %v1107
    %v1114 = vsub.f32 %v1102, %v1108
    %v1115 = vsub.f32 %v1103, %v1109
    %v1116 = vsub.f32 %v1104, %v1110
    %v1117 = vsub.f32 %v1105, %v1111
    %v1118 = vadd.f32 %v1112, 1e-05
    %v1119 = vadd.f32 %v1113, 1e-05
    %v1120 = vadd.f32 %v1114, 1e-05
    %v1121 = vadd.f32 %v1115, 1e-05
    %v1122 = vadd.f32 %v1116, 1e-05
    %v1123 = vadd.f32 %v1117, 1e-05
    %v1124 = vrsqrt.pop %v1118
    %v1125 = vrsqrt.pop %v1119
    %v1126 = vrsqrt.pop %v1120
    %v1127 = vrsqrt.pop %v1121
    %v1128 = vrsqrt.pop %v1122
    %v1129 = vrsqrt.pop %v1123
    %v1130 = vlaneseq
    %v1131 = vshrl.u32 %v1130, 7
    %v1132 = vsub.s32 0, %v1131
    %v1133 = vrot.slane %v1062, %v1132
    %v1134 = vmul.f32 %v1133, %v1124
    %v1135 = vmul.f32 %v1133, %v1125
    %v1136 = vmul.f32 %v1133, %v1126
    %v1137 = vmul.f32 %v1133, %v1127
    %v1138 = vmul.f32 %v1133, %v1128
    %v1139 = vmul.f32 %v1133, %v1129
    %v1140 = vsub.f32 %v1056, %v1076
    %v1141 = vsub.f32 %v1057, %v1077
    %v1142 = vsub.f32 %v1058, %v1078
    %v1143 = vsub.f32 %v1059, %v1079
    %v1144 = vsub.f32 %v1060, %v1080
    %v1145 = vsub.f32 %v1061, %v1081
    %v1146 = vmul.f32 %v1140, %v1134
    %v1147 = vmul.f32 %v1141, %v1135
    %v1148 = vmul.f32 %v1142, %v1136
    %v1149 = vmul.f32 %v1143, %v1137
    %v1150 = vmul.f32 %v1144, %v1138
    %v1151 = vmul.f32 %v1145, %v1139
    %v1152 = vlaneseq
    %v1153 = vshrl.u32 %v1152, 7
    %v1154 = vsub.s32 0, %v1153
    %v1155 = vrot.slane %v1063, %v1154
    %v1156 = vadd.f32 %v1146, %v1155
    %v1157 = vadd.f32 %v1147, %v1155
    %v1158 = vadd.f32 %v1148, %v1155
    %v1159 = vadd.f32 %v1149, %v1155
    %v1160 = vadd.f32 %v1150, %v1155
    %v1161 = vadd.f32 %v1151, %v1155
    %v1162 = vmax.f32 %v1156, 0.0
    %v1163 = vmax.f32 %v1157, 0.0
    %v1164 = vmax.f32 %v1158, 0.0
    %v1165 = vmax.f32 %v1159, 0.0
    %v1166 = vmax.f32 %v1160, 0.0
    %v1167 = vmax.f32 %v1161, 0.0
    %v1168 = vld [vmem:[%s3 + $0x6] sm:$0x1]
    %v1169 = vlaneseq
    %v1170 = vshrl.u32 %v1169, 7
    %v1171 = vsub.s32 0, %v1170
    %v1172 = vrot.slane %v1168, %v1171
    %v1173 = vmul.f32 %v1162, %v1172
    %v1174 = vmul.f32 %v1163, %v1172
    %v1175 = vmul.f32 %v1164, %v1172
    %v1176 = vmul.f32 %v1165, %v1172
    %v1177 = vmul.f32 %v1166, %v1172
    %v1178 = vmul.f32 %v1167, %v1172
    %1179 = vadd.xlane.f32.xlu0 %v1173
    %v1180 = vpop.xlane.xlu0 %1179
    %1181 = vadd.xlane.f32.xlu0 %v1174
    %v1182 = vpop.xlane.xlu0 %1181
    %1183 = vadd.xlane.f32.xlu0 %v1175
    %v1184 = vpop.xlane.xlu0 %1183
    %1185 = vadd.xlane.f32.xlu0 %v1176
    %v1186 = vpop.xlane.xlu0 %1185
    %1187 = vadd.xlane.f32.xlu0 %v1177
    %v1188 = vpop.xlane.xlu0 %1187
    %1189 = vadd.xlane.f32.xlu0 %v1178
    %v1190 = vpop.xlane.xlu0 %1189
    %s1191 = sld [smem:[#allocation3]]
    %v1192 = vstv %s1191
    %v1193 = vadd.f32 %v1180, %v1192
    %v1194 = vadd.f32 %v1182, %v1192
    %v1195 = vadd.f32 %v1184, %v1192
    %v1196 = vadd.f32 %v1186, %v1192
    %v1197 = vadd.f32 %v1188, %v1192
    %v1198 = vadd.f32 %v1190, %v1192
    %v1199 = vmax.f32 %v1193, 0.0
    %v1200 = vmax.f32 %v1194, 0.0
    %v1201 = vmax.f32 %v1195, 0.0
    %v1202 = vmax.f32 %v1196, 0.0
    %v1203 = vmax.f32 %v1197, 0.0
    %v1204 = vmax.f32 %v1198, 0.0
    %v1211 = vlaneseq
    %v1212 = vand.u32 %v1211, 127
    %v1213 = vlaneseq
    %v1214 = vshrl.u32 %v1213, 7
    %v1215 = vsub.s32 %v1212, %v1214
    %v1216 = vrot.slane %v1199, %v1215
    %v1217 = vadd.s32 %v1212, 4294967288
    %v1218 = vlaneseq
    %v1219 = vshrl.u32 %v1218, 7
    %v1220 = vsub.s32 %v1217, %v1219
    %v1221 = vrot.slane %v1200, %v1220
    %vm1222 = vcmask 130112
    %v1223 = vsel %vm1222, %v1221, %v1216
    %v1224 = vlaneseq
    %v1225 = vshrl.u32 %v1224, 7
    %v1226 = vsub.s32 %v1212, %v1225
    %v1227 = vrot.slane %v1201, %v1226
    %v1228 = vlaneseq
    %v1229 = vshrl.u32 %v1228, 7
    %v1230 = vsub.s32 %v1217, %v1229
    %v1231 = vrot.slane %v1202, %v1230
    %v1232 = vsel %vm1222, %v1231, %v1227
    %v1233 = vlaneseq
    %v1234 = vshrl.u32 %v1233, 7
    %v1235 = vsub.s32 %v1212, %v1234
    %v1236 = vrot.slane %v1203, %v1235
    %v1237 = vlaneseq
    %v1238 = vshrl.u32 %v1237, 7
    %v1239 = vsub.s32 %v1217, %v1238
    %v1240 = vrot.slane %v1204, %v1239
    %v1241 = vsel %vm1222, %v1240, %v1236
    %vm1242 = vcmask 1041409
    %v1243 = vsel %vm1242, %v1232, %v1223
    %vm1244 = vcmask 1042434
    %v1245 = vsel %vm1244, %v1241, %v1243
    %vm1247 = vcmask 92160
    %1248 = vst.msk [vmem:[%s6] sm:$0x7] %vm1247, %v1245
    // Predicated region
    $region34: #{tpu_custom_call.1} parent=1 // pred_check
      _
    $region35: #{tpu_custom_call.1} parent=1 // pred_check_branch
      %1250 = sbr.rel (0) target = $region37
    $region36: #{tpu_custom_call.1} parent=1 // pred_region
      _
    $region37: #{tpu_custom_call.1} parent=1 // pred_fallthru
      _
    // Predicated region
    $region38: #{tpu_custom_call.1} parent=1 // pred_check
      _
    $region39: #{tpu_custom_call.1} parent=1 // pred_check_branch
      %1252 = sbr.rel (0) target = $region41
    $region40: #{tpu_custom_call.1} parent=1 // pred_region
      _
    $region41: #{tpu_custom_call.1} parent=1 // pred_fallthru
      _
    %1253 = vsyncpa [#allocation5], 1
    %1254 = vsyncpa [#allocation7], 1

</llo_original>
